<compile_context>
chip_gen: v5e
topology: v5e:2x2
jax: 0.10.0
libtpu: 0.0.40
codegen_flags: <defaults>
</compile_context>

<pallas_src>
import jax
import jax.numpy as jnp
from jax import lax
from jax.experimental import pallas as pl
from jax.experimental.pallas import tpu as pltpu

# Small shapes consistent with the module (orig: MAX_LEN=35, EMB=300, HIDDEN=300)
MAX_LEN = 8        # fc out_size and padded sequence length
EMB_DIM = 32
HIDDEN_DIM = 32
VOCAB = 50
PAD_IDX = 0

H_PAD = 128        # each gate block padded to a full 128-lane vreg width
OUT_PAD = 128      # FC output padded to 128 lanes -> unmasked (lane-dense) store
B_SUBLANE = 8      # pad batch to a multiple of 8 f32 sublanes


def rnn_kernel(emb_ref,        # (S*Bp, E)      f32
               wih_ref,        # (E, 8*Hp)      [fwd i|f|g|o , bwd i|f|g|o], each block Hp wide
               bih_ref,        # (1, 8*Hp)      combined b_ih + b_hh, gate-padded
               whh_f_ref,      # (Hp, 4*Hp)     forward recurrent weights, gate-padded
               wfc_f_ref,      # (Hp, OUT_PAD)  FC weights acting on forward hidden
               wfc_b_ref,      # (Hp, OUT_PAD)  FC weights acting on backward hidden
               bfc_ref,        # (1, OUT_PAD)
               out_ref):       # (Bp, OUT_PAD)
    Bp, _ = out_ref.shape
    Hp = whh_f_ref.shape[0]
    S = emb_ref.shape[0] // Bp
    GF = 4 * Hp

    # Hoisted input projection for both directions + bias: one big MXU matmul,
    # no broadcast/add left inside the recurrence.
    gates_in = (jnp.dot(emb_ref[...], wih_ref[...],
                        preferred_element_type=jnp.float32)
                + bih_ref[...])                                # (S*Bp, 8*Hp)

    whh_f = whh_f_ref[...]

    def gate_math(gates, c):
        # PyTorch LSTM gate order: i, f, g, o — each block is a whole 128-lane vreg.
        i = jax.nn.sigmoid(gates[:, 0 * Hp:1 * Hp])
        f = jax.nn.sigmoid(gates[:, 1 * Hp:2 * Hp])
        g = jnp.tanh(gates[:, 2 * Hp:3 * Hp])
        o = jax.nn.sigmoid(gates[:, 3 * Hp:4 * Hp])
        c_new = f * c + i * g
        h_new = o * jnp.tanh(c_new)
        return h_new, c_new

    h = jnp.zeros((Bp, Hp), jnp.float32)
    c = jnp.zeros((Bp, Hp), jnp.float32)

    # Fully unrolled forward recurrence: one MXU matmul per step on the carried chain.
    # (Padded gate columns stay exactly zero -> padded h/c lanes remain zero.)
    for t in range(S):
        g_in = gates_in[t * Bp:(t + 1) * Bp, :GF]              # sublane/lane aligned slice
        gates = g_in + jnp.dot(h, whh_f, preferred_element_type=jnp.float32)
        h, c = gate_math(gates, c)
    h_fwd = h

    # Backward direction at the LAST timestep == one cell step on x[S-1] from the
    # zero initial state; h0 @ W_hh_b == 0 so no recurrent matmul is needed.
    # Only valid because out width == MAX_LEN and sequences have fixed padded length.
    g_in_b = gates_in[(S - 1) * Bp:S * Bp, GF:2 * GF]
    h_bwd, _ = gate_math(g_in_b, jnp.zeros((Bp, Hp), jnp.float32))

    # ReLU (dropout is identity in eval); split FC avoids a lane-axis concatenate.
    act_f = jnp.maximum(h_fwd, 0.0)
    act_b = jnp.maximum(h_bwd, 0.0)
    out_ref[...] = (jnp.dot(act_f, wfc_f_ref[...], preferred_element_type=jnp.float32)
                    + jnp.dot(act_b, wfc_b_ref[...], preferred_element_type=jnp.float32)
                    + bfc_ref[...])


def _pad_gate_cols(w, h, hp):
    """(..., 4*h) -> (..., 4*hp): pad each of the 4 gate blocks to hp columns."""
    lead = w.shape[:-1]
    w4 = w.reshape(lead + (4, h))
    pad = [(0, 0)] * len(lead) + [(0, 0), (0, hp - h)]
    return jnp.pad(w4, pad).reshape(lead + (4 * hp,))


def rnn_forward(sentiment, tokens, params):
    """sentiment: (B,) int32, tokens: (B, T) int32  ->  (B, MAX_LEN) f32."""
    # torch.cat([sentiment.unsqueeze(1).t(), input.t()]).t() == prepend sentiment token
    tok = jnp.concatenate([sentiment[:, None], tokens], axis=1)        # (B, S), S = T+1
    # Embedding lookup (gather) is glue, done in plain JAX.
    emb = jnp.take(params['emb'], tok, axis=0).astype(jnp.float32)     # (B, S, E)
    B, S, E = emb.shape
    H, Hp = HIDDEN_DIM, H_PAD
    Bp = ((B + B_SUBLANE - 1) // B_SUBLANE) * B_SUBLANE                # sublane-padded batch

    emb_sbe = jnp.transpose(emb, (1, 0, 2))                            # (S, B, E) time-major
    emb_sbe = jnp.pad(emb_sbe, ((0, 0), (0, Bp - B), (0, 0)))          # pad batch rows w/ zeros
    emb_flat = emb_sbe.reshape(S * Bp, E)                              # (S*Bp, E)

    # Weight padding / packing (done once per call in plain JAX).
    wih = jnp.concatenate([_pad_gate_cols(params['wih_f'], H, Hp),
                           _pad_gate_cols(params['wih_b'], H, Hp)], axis=1)   # (E, 8Hp)
    bih = jnp.concatenate([_pad_gate_cols(params['b_f'], H, Hp),
                           _pad_gate_cols(params['b_b'], H, Hp)], axis=1)     # (1, 8Hp)
    whh_f = _pad_gate_cols(jnp.pad(params['whh_f'], ((0, Hp - H), (0, 0))),
                           H, Hp)                                             # (Hp, 4Hp)
    wfc_f = jnp.pad(params['wfc'][:H], ((0, Hp - H), (0, OUT_PAD - MAX_LEN)))  # (Hp, OUT_PAD)
    wfc_b = jnp.pad(params['wfc'][H:], ((0, Hp - H), (0, OUT_PAD - MAX_LEN)))  # (Hp, OUT_PAD)
    bfc = jnp.pad(params['bfc'], ((0, 0), (0, OUT_PAD - MAX_LEN)))             # (1, OUT_PAD)

    out_pad = pl.pallas_call(
        rnn_kernel,
        out_shape=jax.ShapeDtypeStruct((Bp, OUT_PAD), jnp.float32),
        in_specs=[pl.BlockSpec(memory_space=pltpu.MemorySpace.VMEM)] * 7,
        out_specs=pl.BlockSpec(memory_space=pltpu.MemorySpace.VMEM),
    )(emb_flat, wih, bih, whh_f, wfc_f, wfc_b, bfc)

    return out_pad[:B, :MAX_LEN]


def init_params(key):
    ks = jax.random.split(key, 11)
    H, E = HIDDEN_DIM, EMB_DIM
    k_lstm = 1.0 / jnp.sqrt(H)
    k_fc = 1.0 / jnp.sqrt(2 * H)

    def unif(k, shape, bound):
        return jax.random.uniform(k, shape, jnp.float32, -bound, bound)

    emb = 0.1 * jax.random.normal(ks[0], (VOCAB, E), jnp.float32)
    emb = emb.at[PAD_IDX].set(0.0)                      # padding_idx row zeroed

    params = dict(
        emb=emb,
        # stored transposed (in, out); bias = b_ih + b_hh folded into one row vector
        wih_f=unif(ks[1], (E, 4 * H), k_lstm),
        whh_f=unif(ks[2], (H, 4 * H), k_lstm),
        b_f=unif(ks[3], (1, 4 * H), k_lstm) + unif(ks[4], (1, 4 * H), k_lstm),
        wih_b=unif(ks[5], (E, 4 * H), k_lstm),
        whh_b=unif(ks[6], (H, 4 * H), k_lstm),   # used by the reference scan only
        b_b=unif(ks[7], (1, 4 * H), k_lstm) + unif(ks[8], (1, 4 * H), k_lstm),
        wfc=unif(ks[9], (2 * H, MAX_LEN), k_fc),
        bfc=jnp.zeros((1, MAX_LEN), jnp.float32),
    )
    return params


def reference_forward(sentiment, tokens, params):
    """Pure-JAX replica of the PyTorch forward (eval mode) for validation."""
    tok = jnp.concatenate([sentiment[:, None], tokens], axis=1)
    emb = jnp.take(params['emb'], tok, axis=0).astype(jnp.float32)     # (B, S, E)
    B, S, _ = emb.shape
    H = HIDDEN_DIM

    def make_step(wih, whh, b):
        def step(carry, x):
            h, c = carry
            gates = x @ wih + h @ whh + b
            i = jax.nn.sigmoid(gates[:, :H])
            f = jax.nn.sigmoid(gates[:, H:2 * H])
            g = jnp.tanh(gates[:, 2 * H:3 * H])
            o = jax.nn.sigmoid(gates[:, 3 * H:])
            c = f * c + i * g
            h = o * jnp.tanh(c)
            return (h, c), h
        return step

    h0 = jnp.zeros((B, H), jnp.float32)
    c0 = jnp.zeros((B, H), jnp.float32)
    xs = jnp.transpose(emb, (1, 0, 2))                                  # (S, B, E)
    _, hs_f = lax.scan(make_step(params['wih_f'], params['whh_f'], params['b_f']),
                       (h0, c0), xs)
    _, hs_b = lax.scan(make_step(params['wih_b'], params['whh_b'], params['b_b']),
                       (h0, c0), xs[::-1])
    hs_b = hs_b[::-1]
    rnn_out = jnp.transpose(jnp.concatenate([hs_f, hs_b], axis=-1), (1, 0, 2))  # (B, S, 2H)
    out = jnp.maximum(rnn_out, 0.0)                 # ReLU; dropout(p=0.1) is identity in eval
    out = out @ params['wfc'] + params['bfc']       # (B, S, MAX_LEN)
    out = out.reshape(B, -1)
    return out[:, -MAX_LEN:]


if __name__ == "__main__":
    key = jax.random.PRNGKey(0)
    kp, ks, kt = jax.random.split(key, 3)

    B, T = 4, MAX_LEN                     # sequences padded to MAX_LEN by Padder
    params = init_params(kp)
    sentiment = jax.random.randint(ks, (B,), 3, VOCAB, dtype=jnp.int32)
    tokens = jax.random.randint(kt, (B, T), 0, VOCAB, dtype=jnp.int32)

    preds = rnn_forward(sentiment, tokens, params)
    preds = jax.block_until_ready(preds)

    ref = reference_forward(sentiment, tokens, params)
    assert preds.shape == (B, MAX_LEN), preds.shape
    assert jnp.allclose(preds, ref, atol=1e-3, rtol=1e-3), "mismatch vs pure-JAX reference"

    print("KERNEL_OK")
</pallas_src>

<mosaic_0001>
module attributes {stable_mosaic.version = 11 : i64} {
  func.func @rnn_kernel(%arg0: memref<72x32xf32, #tpu.memory_space<vmem>>, %arg1: memref<32x1024xf32, #tpu.memory_space<vmem>>, %arg2: memref<1x1024xf32, #tpu.memory_space<vmem>>, %arg3: memref<128x512xf32, #tpu.memory_space<vmem>>, %arg4: memref<128x128xf32, #tpu.memory_space<vmem>>, %arg5: memref<128x128xf32, #tpu.memory_space<vmem>>, %arg6: memref<1x128xf32, #tpu.memory_space<vmem>>, %arg7: memref<8x128xf32, #tpu.memory_space<vmem>>) attributes {dimension_semantics = [], scalar_prefetch = 0 : i64, scratch_operands = 0 : i64, tpu.core_type = #tpu.core_type<tc>} {
    %c0 = arith.constant 0 : index
    %c0_0 = arith.constant 0 : index
    %0 = vector.load %arg0[%c0, %c0_0] : memref<72x32xf32, #tpu.memory_space<vmem>>, vector<72x32xf32>
    %c0_1 = arith.constant 0 : index
    %c0_2 = arith.constant 0 : index
    %1 = vector.load %arg1[%c0_1, %c0_2] : memref<32x1024xf32, #tpu.memory_space<vmem>>, vector<32x1024xf32>
    %cst = arith.constant dense<0.000000e+00> : vector<72x1024xf32>
    %2 = tpu.matmul %0, %1, %cst {dimension_numbers = #tpu.dot_dimension_numbers<[1], [0], [0], [1], [0, 0, 1, 1], [], []>} : vector<72x32xf32>, vector<32x1024xf32>, vector<72x1024xf32> -> vector<72x1024xf32>
    %c0_3 = arith.constant 0 : index
    %c0_4 = arith.constant 0 : index
    %3 = vector.load %arg2[%c0_3, %c0_4] : memref<1x1024xf32, #tpu.memory_space<vmem>>, vector<1x1024xf32>
    %4 = vector.broadcast %3 : vector<1x1024xf32> to vector<72x1024xf32>
    %5 = arith.addf %2, %4 : vector<72x1024xf32>
    %c0_5 = arith.constant 0 : index
    %c0_6 = arith.constant 0 : index
    %6 = vector.load %arg3[%c0_5, %c0_6] : memref<128x512xf32, #tpu.memory_space<vmem>>, vector<128x512xf32>
    %cst_7 = arith.constant 0.000000e+00 : f32
    %7 = vector.broadcast %cst_7 : f32 to vector<8x128xf32>
    %cst_8 = arith.constant 0.000000e+00 : f32
    %8 = vector.broadcast %cst_8 : f32 to vector<8x128xf32>
    %9 = vector.extract_strided_slice %5 {offsets = [0, 0], sizes = [8, 512], strides = [1, 1]} : vector<72x1024xf32> to vector<8x512xf32>
    %cst_9 = arith.constant dense<0.000000e+00> : vector<8x512xf32>
    %10 = tpu.matmul %7, %6, %cst_9 {dimension_numbers = #tpu.dot_dimension_numbers<[1], [0], [0], [1], [0, 0, 1, 1], [], []>} : vector<8x128xf32>, vector<128x512xf32>, vector<8x512xf32> -> vector<8x512xf32>
    %11 = arith.addf %9, %10 : vector<8x512xf32>
    %12 = vector.extract_strided_slice %11 {offsets = [0, 0], sizes = [8, 128], strides = [1, 1]} : vector<8x512xf32> to vector<8x128xf32>
    %13 = arith.negf %12 : vector<8x128xf32>
    %14 = math.exp %13 : vector<8x128xf32>
    %cst_10 = arith.constant 1.000000e+00 : f32
    %15 = vector.broadcast %cst_10 : f32 to vector<8x128xf32>
    %16 = arith.addf %15, %14 : vector<8x128xf32>
    %17 = arith.divf %15, %16 : vector<8x128xf32>
    %18 = vector.extract_strided_slice %11 {offsets = [0, 128], sizes = [8, 128], strides = [1, 1]} : vector<8x512xf32> to vector<8x128xf32>
    %19 = arith.negf %18 : vector<8x128xf32>
    %20 = math.exp %19 : vector<8x128xf32>
    %cst_11 = arith.constant 1.000000e+00 : f32
    %21 = vector.broadcast %cst_11 : f32 to vector<8x128xf32>
    %22 = arith.addf %21, %20 : vector<8x128xf32>
    %23 = arith.divf %21, %22 : vector<8x128xf32>
    %24 = vector.extract_strided_slice %11 {offsets = [0, 256], sizes = [8, 128], strides = [1, 1]} : vector<8x512xf32> to vector<8x128xf32>
    %25 = math.tanh %24 : vector<8x128xf32>
    %26 = vector.extract_strided_slice %11 {offsets = [0, 384], sizes = [8, 128], strides = [1, 1]} : vector<8x512xf32> to vector<8x128xf32>
    %27 = arith.negf %26 : vector<8x128xf32>
    %28 = math.exp %27 : vector<8x128xf32>
    %cst_12 = arith.constant 1.000000e+00 : f32
    %29 = vector.broadcast %cst_12 : f32 to vector<8x128xf32>
    %30 = arith.addf %29, %28 : vector<8x128xf32>
    %31 = arith.divf %29, %30 : vector<8x128xf32>
    %32 = arith.mulf %23, %8 : vector<8x128xf32>
    %33 = arith.mulf %17, %25 : vector<8x128xf32>
    %34 = arith.addf %32, %33 : vector<8x128xf32>
    %35 = math.tanh %34 : vector<8x128xf32>
    %36 = arith.mulf %31, %35 : vector<8x128xf32>
    %37 = vector.extract_strided_slice %5 {offsets = [8, 0], sizes = [8, 512], strides = [1, 1]} : vector<72x1024xf32> to vector<8x512xf32>
    %cst_13 = arith.constant dense<0.000000e+00> : vector<8x512xf32>
    %38 = tpu.matmul %36, %6, %cst_13 {dimension_numbers = #tpu.dot_dimension_numbers<[1], [0], [0], [1], [0, 0, 1, 1], [], []>} : vector<8x128xf32>, vector<128x512xf32>, vector<8x512xf32> -> vector<8x512xf32>
    %39 = arith.addf %37, %38 : vector<8x512xf32>
    %40 = vector.extract_strided_slice %39 {offsets = [0, 0], sizes = [8, 128], strides = [1, 1]} : vector<8x512xf32> to vector<8x128xf32>
    %41 = arith.negf %40 : vector<8x128xf32>
    %42 = math.exp %41 : vector<8x128xf32>
    %cst_14 = arith.constant 1.000000e+00 : f32
    %43 = vector.broadcast %cst_14 : f32 to vector<8x128xf32>
    %44 = arith.addf %43, %42 : vector<8x128xf32>
    %45 = arith.divf %43, %44 : vector<8x128xf32>
    %46 = vector.extract_strided_slice %39 {offsets = [0, 128], sizes = [8, 128], strides = [1, 1]} : vector<8x512xf32> to vector<8x128xf32>
    %47 = arith.negf %46 : vector<8x128xf32>
    %48 = math.exp %47 : vector<8x128xf32>
    %cst_15 = arith.constant 1.000000e+00 : f32
    %49 = vector.broadcast %cst_15 : f32 to vector<8x128xf32>
    %50 = arith.addf %49, %48 : vector<8x128xf32>
    %51 = arith.divf %49, %50 : vector<8x128xf32>
    %52 = vector.extract_strided_slice %39 {offsets = [0, 256], sizes = [8, 128], strides = [1, 1]} : vector<8x512xf32> to vector<8x128xf32>
    %53 = math.tanh %52 : vector<8x128xf32>
    %54 = vector.extract_strided_slice %39 {offsets = [0, 384], sizes = [8, 128], strides = [1, 1]} : vector<8x512xf32> to vector<8x128xf32>
    %55 = arith.negf %54 : vector<8x128xf32>
    %56 = math.exp %55 : vector<8x128xf32>
    %cst_16 = arith.constant 1.000000e+00 : f32
    %57 = vector.broadcast %cst_16 : f32 to vector<8x128xf32>
    %58 = arith.addf %57, %56 : vector<8x128xf32>
    %59 = arith.divf %57, %58 : vector<8x128xf32>
    %60 = arith.mulf %51, %34 : vector<8x128xf32>
    %61 = arith.mulf %45, %53 : vector<8x128xf32>
    %62 = arith.addf %60, %61 : vector<8x128xf32>
    %63 = math.tanh %62 : vector<8x128xf32>
    %64 = arith.mulf %59, %63 : vector<8x128xf32>
    %65 = vector.extract_strided_slice %5 {offsets = [16, 0], sizes = [8, 512], strides = [1, 1]} : vector<72x1024xf32> to vector<8x512xf32>
    %cst_17 = arith.constant dense<0.000000e+00> : vector<8x512xf32>
    %66 = tpu.matmul %64, %6, %cst_17 {dimension_numbers = #tpu.dot_dimension_numbers<[1], [0], [0], [1], [0, 0, 1, 1], [], []>} : vector<8x128xf32>, vector<128x512xf32>, vector<8x512xf32> -> vector<8x512xf32>
    %67 = arith.addf %65, %66 : vector<8x512xf32>
    %68 = vector.extract_strided_slice %67 {offsets = [0, 0], sizes = [8, 128], strides = [1, 1]} : vector<8x512xf32> to vector<8x128xf32>
    %69 = arith.negf %68 : vector<8x128xf32>
    %70 = math.exp %69 : vector<8x128xf32>
    %cst_18 = arith.constant 1.000000e+00 : f32
    %71 = vector.broadcast %cst_18 : f32 to vector<8x128xf32>
    %72 = arith.addf %71, %70 : vector<8x128xf32>
    %73 = arith.divf %71, %72 : vector<8x128xf32>
    %74 = vector.extract_strided_slice %67 {offsets = [0, 128], sizes = [8, 128], strides = [1, 1]} : vector<8x512xf32> to vector<8x128xf32>
    %75 = arith.negf %74 : vector<8x128xf32>
    %76 = math.exp %75 : vector<8x128xf32>
    %cst_19 = arith.constant 1.000000e+00 : f32
    %77 = vector.broadcast %cst_19 : f32 to vector<8x128xf32>
    %78 = arith.addf %77, %76 : vector<8x128xf32>
    %79 = arith.divf %77, %78 : vector<8x128xf32>
    %80 = vector.extract_strided_slice %67 {offsets = [0, 256], sizes = [8, 128], strides = [1, 1]} : vector<8x512xf32> to vector<8x128xf32>
    %81 = math.tanh %80 : vector<8x128xf32>
    %82 = vector.extract_strided_slice %67 {offsets = [0, 384], sizes = [8, 128], strides = [1, 1]} : vector<8x512xf32> to vector<8x128xf32>
    %83 = arith.negf %82 : vector<8x128xf32>
    %84 = math.exp %83 : vector<8x128xf32>
    %cst_20 = arith.constant 1.000000e+00 : f32
    %85 = vector.broadcast %cst_20 : f32 to vector<8x128xf32>
    %86 = arith.addf %85, %84 : vector<8x128xf32>
    %87 = arith.divf %85, %86 : vector<8x128xf32>
    %88 = arith.mulf %79, %62 : vector<8x128xf32>
    %89 = arith.mulf %73, %81 : vector<8x128xf32>
    %90 = arith.addf %88, %89 : vector<8x128xf32>
    %91 = math.tanh %90 : vector<8x128xf32>
    %92 = arith.mulf %87, %91 : vector<8x128xf32>
    %93 = vector.extract_strided_slice %5 {offsets = [24, 0], sizes = [8, 512], strides = [1, 1]} : vector<72x1024xf32> to vector<8x512xf32>
    %cst_21 = arith.constant dense<0.000000e+00> : vector<8x512xf32>
    %94 = tpu.matmul %92, %6, %cst_21 {dimension_numbers = #tpu.dot_dimension_numbers<[1], [0], [0], [1], [0, 0, 1, 1], [], []>} : vector<8x128xf32>, vector<128x512xf32>, vector<8x512xf32> -> vector<8x512xf32>
    %95 = arith.addf %93, %94 : vector<8x512xf32>
    %96 = vector.extract_strided_slice %95 {offsets = [0, 0], sizes = [8, 128], strides = [1, 1]} : vector<8x512xf32> to vector<8x128xf32>
    %97 = arith.negf %96 : vector<8x128xf32>
    %98 = math.exp %97 : vector<8x128xf32>
    %cst_22 = arith.constant 1.000000e+00 : f32
    %99 = vector.broadcast %cst_22 : f32 to vector<8x128xf32>
    %100 = arith.addf %99, %98 : vector<8x128xf32>
    %101 = arith.divf %99, %100 : vector<8x128xf32>
    %102 = vector.extract_strided_slice %95 {offsets = [0, 128], sizes = [8, 128], strides = [1, 1]} : vector<8x512xf32> to vector<8x128xf32>
    %103 = arith.negf %102 : vector<8x128xf32>
    %104 = math.exp %103 : vector<8x128xf32>
    %cst_23 = arith.constant 1.000000e+00 : f32
    %105 = vector.broadcast %cst_23 : f32 to vector<8x128xf32>
    %106 = arith.addf %105, %104 : vector<8x128xf32>
    %107 = arith.divf %105, %106 : vector<8x128xf32>
    %108 = vector.extract_strided_slice %95 {offsets = [0, 256], sizes = [8, 128], strides = [1, 1]} : vector<8x512xf32> to vector<8x128xf32>
    %109 = math.tanh %108 : vector<8x128xf32>
    %110 = vector.extract_strided_slice %95 {offsets = [0, 384], sizes = [8, 128], strides = [1, 1]} : vector<8x512xf32> to vector<8x128xf32>
    %111 = arith.negf %110 : vector<8x128xf32>
    %112 = math.exp %111 : vector<8x128xf32>
    %cst_24 = arith.constant 1.000000e+00 : f32
    %113 = vector.broadcast %cst_24 : f32 to vector<8x128xf32>
    %114 = arith.addf %113, %112 : vector<8x128xf32>
    %115 = arith.divf %113, %114 : vector<8x128xf32>
    %116 = arith.mulf %107, %90 : vector<8x128xf32>
    %117 = arith.mulf %101, %109 : vector<8x128xf32>
    %118 = arith.addf %116, %117 : vector<8x128xf32>
    %119 = math.tanh %118 : vector<8x128xf32>
    %120 = arith.mulf %115, %119 : vector<8x128xf32>
    %121 = vector.extract_strided_slice %5 {offsets = [32, 0], sizes = [8, 512], strides = [1, 1]} : vector<72x1024xf32> to vector<8x512xf32>
    %cst_25 = arith.constant dense<0.000000e+00> : vector<8x512xf32>
    %122 = tpu.matmul %120, %6, %cst_25 {dimension_numbers = #tpu.dot_dimension_numbers<[1], [0], [0], [1], [0, 0, 1, 1], [], []>} : vector<8x128xf32>, vector<128x512xf32>, vector<8x512xf32> -> vector<8x512xf32>
    %123 = arith.addf %121, %122 : vector<8x512xf32>
    %124 = vector.extract_strided_slice %123 {offsets = [0, 0], sizes = [8, 128], strides = [1, 1]} : vector<8x512xf32> to vector<8x128xf32>
    %125 = arith.negf %124 : vector<8x128xf32>
    %126 = math.exp %125 : vector<8x128xf32>
    %cst_26 = arith.constant 1.000000e+00 : f32
    %127 = vector.broadcast %cst_26 : f32 to vector<8x128xf32>
    %128 = arith.addf %127, %126 : vector<8x128xf32>
    %129 = arith.divf %127, %128 : vector<8x128xf32>
    %130 = vector.extract_strided_slice %123 {offsets = [0, 128], sizes = [8, 128], strides = [1, 1]} : vector<8x512xf32> to vector<8x128xf32>
    %131 = arith.negf %130 : vector<8x128xf32>
    %132 = math.exp %131 : vector<8x128xf32>
    %cst_27 = arith.constant 1.000000e+00 : f32
    %133 = vector.broadcast %cst_27 : f32 to vector<8x128xf32>
    %134 = arith.addf %133, %132 : vector<8x128xf32>
    %135 = arith.divf %133, %134 : vector<8x128xf32>
    %136 = vector.extract_strided_slice %123 {offsets = [0, 256], sizes = [8, 128], strides = [1, 1]} : vector<8x512xf32> to vector<8x128xf32>
    %137 = math.tanh %136 : vector<8x128xf32>
    %138 = vector.extract_strided_slice %123 {offsets = [0, 384], sizes = [8, 128], strides = [1, 1]} : vector<8x512xf32> to vector<8x128xf32>
    %139 = arith.negf %138 : vector<8x128xf32>
    %140 = math.exp %139 : vector<8x128xf32>
    %cst_28 = arith.constant 1.000000e+00 : f32
    %141 = vector.broadcast %cst_28 : f32 to vector<8x128xf32>
    %142 = arith.addf %141, %140 : vector<8x128xf32>
    %143 = arith.divf %141, %142 : vector<8x128xf32>
    %144 = arith.mulf %135, %118 : vector<8x128xf32>
    %145 = arith.mulf %129, %137 : vector<8x128xf32>
    %146 = arith.addf %144, %145 : vector<8x128xf32>
    %147 = math.tanh %146 : vector<8x128xf32>
    %148 = arith.mulf %143, %147 : vector<8x128xf32>
    %149 = vector.extract_strided_slice %5 {offsets = [40, 0], sizes = [8, 512], strides = [1, 1]} : vector<72x1024xf32> to vector<8x512xf32>
    %cst_29 = arith.constant dense<0.000000e+00> : vector<8x512xf32>
    %150 = tpu.matmul %148, %6, %cst_29 {dimension_numbers = #tpu.dot_dimension_numbers<[1], [0], [0], [1], [0, 0, 1, 1], [], []>} : vector<8x128xf32>, vector<128x512xf32>, vector<8x512xf32> -> vector<8x512xf32>
    %151 = arith.addf %149, %150 : vector<8x512xf32>
    %152 = vector.extract_strided_slice %151 {offsets = [0, 0], sizes = [8, 128], strides = [1, 1]} : vector<8x512xf32> to vector<8x128xf32>
    %153 = arith.negf %152 : vector<8x128xf32>
    %154 = math.exp %153 : vector<8x128xf32>
    %cst_30 = arith.constant 1.000000e+00 : f32
    %155 = vector.broadcast %cst_30 : f32 to vector<8x128xf32>
    %156 = arith.addf %155, %154 : vector<8x128xf32>
    %157 = arith.divf %155, %156 : vector<8x128xf32>
    %158 = vector.extract_strided_slice %151 {offsets = [0, 128], sizes = [8, 128], strides = [1, 1]} : vector<8x512xf32> to vector<8x128xf32>
    %159 = arith.negf %158 : vector<8x128xf32>
    %160 = math.exp %159 : vector<8x128xf32>
    %cst_31 = arith.constant 1.000000e+00 : f32
    %161 = vector.broadcast %cst_31 : f32 to vector<8x128xf32>
    %162 = arith.addf %161, %160 : vector<8x128xf32>
    %163 = arith.divf %161, %162 : vector<8x128xf32>
    %164 = vector.extract_strided_slice %151 {offsets = [0, 256], sizes = [8, 128], strides = [1, 1]} : vector<8x512xf32> to vector<8x128xf32>
    %165 = math.tanh %164 : vector<8x128xf32>
    %166 = vector.extract_strided_slice %151 {offsets = [0, 384], sizes = [8, 128], strides = [1, 1]} : vector<8x512xf32> to vector<8x128xf32>
    %167 = arith.negf %166 : vector<8x128xf32>
    %168 = math.exp %167 : vector<8x128xf32>
    %cst_32 = arith.constant 1.000000e+00 : f32
    %169 = vector.broadcast %cst_32 : f32 to vector<8x128xf32>
    %170 = arith.addf %169, %168 : vector<8x128xf32>
    %171 = arith.divf %169, %170 : vector<8x128xf32>
    %172 = arith.mulf %163, %146 : vector<8x128xf32>
    %173 = arith.mulf %157, %165 : vector<8x128xf32>
    %174 = arith.addf %172, %173 : vector<8x128xf32>
    %175 = math.tanh %174 : vector<8x128xf32>
    %176 = arith.mulf %171, %175 : vector<8x128xf32>
    %177 = vector.extract_strided_slice %5 {offsets = [48, 0], sizes = [8, 512], strides = [1, 1]} : vector<72x1024xf32> to vector<8x512xf32>
    %cst_33 = arith.constant dense<0.000000e+00> : vector<8x512xf32>
    %178 = tpu.matmul %176, %6, %cst_33 {dimension_numbers = #tpu.dot_dimension_numbers<[1], [0], [0], [1], [0, 0, 1, 1], [], []>} : vector<8x128xf32>, vector<128x512xf32>, vector<8x512xf32> -> vector<8x512xf32>
    %179 = arith.addf %177, %178 : vector<8x512xf32>
    %180 = vector.extract_strided_slice %179 {offsets = [0, 0], sizes = [8, 128], strides = [1, 1]} : vector<8x512xf32> to vector<8x128xf32>
    %181 = arith.negf %180 : vector<8x128xf32>
    %182 = math.exp %181 : vector<8x128xf32>
    %cst_34 = arith.constant 1.000000e+00 : f32
    %183 = vector.broadcast %cst_34 : f32 to vector<8x128xf32>
    %184 = arith.addf %183, %182 : vector<8x128xf32>
    %185 = arith.divf %183, %184 : vector<8x128xf32>
    %186 = vector.extract_strided_slice %179 {offsets = [0, 128], sizes = [8, 128], strides = [1, 1]} : vector<8x512xf32> to vector<8x128xf32>
    %187 = arith.negf %186 : vector<8x128xf32>
    %188 = math.exp %187 : vector<8x128xf32>
    %cst_35 = arith.constant 1.000000e+00 : f32
    %189 = vector.broadcast %cst_35 : f32 to vector<8x128xf32>
    %190 = arith.addf %189, %188 : vector<8x128xf32>
    %191 = arith.divf %189, %190 : vector<8x128xf32>
    %192 = vector.extract_strided_slice %179 {offsets = [0, 256], sizes = [8, 128], strides = [1, 1]} : vector<8x512xf32> to vector<8x128xf32>
    %193 = math.tanh %192 : vector<8x128xf32>
    %194 = vector.extract_strided_slice %179 {offsets = [0, 384], sizes = [8, 128], strides = [1, 1]} : vector<8x512xf32> to vector<8x128xf32>
    %195 = arith.negf %194 : vector<8x128xf32>
    %196 = math.exp %195 : vector<8x128xf32>
    %cst_36 = arith.constant 1.000000e+00 : f32
    %197 = vector.broadcast %cst_36 : f32 to vector<8x128xf32>
    %198 = arith.addf %197, %196 : vector<8x128xf32>
    %199 = arith.divf %197, %198 : vector<8x128xf32>
    %200 = arith.mulf %191, %174 : vector<8x128xf32>
    %201 = arith.mulf %185, %193 : vector<8x128xf32>
    %202 = arith.addf %200, %201 : vector<8x128xf32>
    %203 = math.tanh %202 : vector<8x128xf32>
    %204 = arith.mulf %199, %203 : vector<8x128xf32>
    %205 = vector.extract_strided_slice %5 {offsets = [56, 0], sizes = [8, 512], strides = [1, 1]} : vector<72x1024xf32> to vector<8x512xf32>
    %cst_37 = arith.constant dense<0.000000e+00> : vector<8x512xf32>
    %206 = tpu.matmul %204, %6, %cst_37 {dimension_numbers = #tpu.dot_dimension_numbers<[1], [0], [0], [1], [0, 0, 1, 1], [], []>} : vector<8x128xf32>, vector<128x512xf32>, vector<8x512xf32> -> vector<8x512xf32>
    %207 = arith.addf %205, %206 : vector<8x512xf32>
    %208 = vector.extract_strided_slice %207 {offsets = [0, 0], sizes = [8, 128], strides = [1, 1]} : vector<8x512xf32> to vector<8x128xf32>
    %209 = arith.negf %208 : vector<8x128xf32>
    %210 = math.exp %209 : vector<8x128xf32>
    %cst_38 = arith.constant 1.000000e+00 : f32
    %211 = vector.broadcast %cst_38 : f32 to vector<8x128xf32>
    %212 = arith.addf %211, %210 : vector<8x128xf32>
    %213 = arith.divf %211, %212 : vector<8x128xf32>
    %214 = vector.extract_strided_slice %207 {offsets = [0, 128], sizes = [8, 128], strides = [1, 1]} : vector<8x512xf32> to vector<8x128xf32>
    %215 = arith.negf %214 : vector<8x128xf32>
    %216 = math.exp %215 : vector<8x128xf32>
    %cst_39 = arith.constant 1.000000e+00 : f32
    %217 = vector.broadcast %cst_39 : f32 to vector<8x128xf32>
    %218 = arith.addf %217, %216 : vector<8x128xf32>
    %219 = arith.divf %217, %218 : vector<8x128xf32>
    %220 = vector.extract_strided_slice %207 {offsets = [0, 256], sizes = [8, 128], strides = [1, 1]} : vector<8x512xf32> to vector<8x128xf32>
    %221 = math.tanh %220 : vector<8x128xf32>
    %222 = vector.extract_strided_slice %207 {offsets = [0, 384], sizes = [8, 128], strides = [1, 1]} : vector<8x512xf32> to vector<8x128xf32>
    %223 = arith.negf %222 : vector<8x128xf32>
    %224 = math.exp %223 : vector<8x128xf32>
    %cst_40 = arith.constant 1.000000e+00 : f32
    %225 = vector.broadcast %cst_40 : f32 to vector<8x128xf32>
    %226 = arith.addf %225, %224 : vector<8x128xf32>
    %227 = arith.divf %225, %226 : vector<8x128xf32>
    %228 = arith.mulf %219, %202 : vector<8x128xf32>
    %229 = arith.mulf %213, %221 : vector<8x128xf32>
    %230 = arith.addf %228, %229 : vector<8x128xf32>
    %231 = math.tanh %230 : vector<8x128xf32>
    %232 = arith.mulf %227, %231 : vector<8x128xf32>
    %233 = vector.extract_strided_slice %5 {offsets = [64, 0], sizes = [8, 512], strides = [1, 1]} : vector<72x1024xf32> to vector<8x512xf32>
    %cst_41 = arith.constant dense<0.000000e+00> : vector<8x512xf32>
    %234 = tpu.matmul %232, %6, %cst_41 {dimension_numbers = #tpu.dot_dimension_numbers<[1], [0], [0], [1], [0, 0, 1, 1], [], []>} : vector<8x128xf32>, vector<128x512xf32>, vector<8x512xf32> -> vector<8x512xf32>
    %235 = arith.addf %233, %234 : vector<8x512xf32>
    %236 = vector.extract_strided_slice %235 {offsets = [0, 0], sizes = [8, 128], strides = [1, 1]} : vector<8x512xf32> to vector<8x128xf32>
    %237 = arith.negf %236 : vector<8x128xf32>
    %238 = math.exp %237 : vector<8x128xf32>
    %cst_42 = arith.constant 1.000000e+00 : f32
    %239 = vector.broadcast %cst_42 : f32 to vector<8x128xf32>
    %240 = arith.addf %239, %238 : vector<8x128xf32>
    %241 = arith.divf %239, %240 : vector<8x128xf32>
    %242 = vector.extract_strided_slice %235 {offsets = [0, 128], sizes = [8, 128], strides = [1, 1]} : vector<8x512xf32> to vector<8x128xf32>
    %243 = arith.negf %242 : vector<8x128xf32>
    %244 = math.exp %243 : vector<8x128xf32>
    %cst_43 = arith.constant 1.000000e+00 : f32
    %245 = vector.broadcast %cst_43 : f32 to vector<8x128xf32>
    %246 = arith.addf %245, %244 : vector<8x128xf32>
    %247 = arith.divf %245, %246 : vector<8x128xf32>
    %248 = vector.extract_strided_slice %235 {offsets = [0, 256], sizes = [8, 128], strides = [1, 1]} : vector<8x512xf32> to vector<8x128xf32>
    %249 = math.tanh %248 : vector<8x128xf32>
    %250 = vector.extract_strided_slice %235 {offsets = [0, 384], sizes = [8, 128], strides = [1, 1]} : vector<8x512xf32> to vector<8x128xf32>
    %251 = arith.negf %250 : vector<8x128xf32>
    %252 = math.exp %251 : vector<8x128xf32>
    %cst_44 = arith.constant 1.000000e+00 : f32
    %253 = vector.broadcast %cst_44 : f32 to vector<8x128xf32>
    %254 = arith.addf %253, %252 : vector<8x128xf32>
    %255 = arith.divf %253, %254 : vector<8x128xf32>
    %256 = arith.mulf %247, %230 : vector<8x128xf32>
    %257 = arith.mulf %241, %249 : vector<8x128xf32>
    %258 = arith.addf %256, %257 : vector<8x128xf32>
    %259 = math.tanh %258 : vector<8x128xf32>
    %260 = arith.mulf %255, %259 : vector<8x128xf32>
    %261 = vector.extract_strided_slice %5 {offsets = [64, 512], sizes = [8, 512], strides = [1, 1]} : vector<72x1024xf32> to vector<8x512xf32>
    %cst_45 = arith.constant 0.000000e+00 : f32
    %262 = vector.broadcast %cst_45 : f32 to vector<8x128xf32>
    %263 = vector.extract_strided_slice %261 {offsets = [0, 0], sizes = [8, 128], strides = [1, 1]} : vector<8x512xf32> to vector<8x128xf32>
    %264 = arith.negf %263 : vector<8x128xf32>
    %265 = math.exp %264 : vector<8x128xf32>
    %cst_46 = arith.constant 1.000000e+00 : f32
    %266 = vector.broadcast %cst_46 : f32 to vector<8x128xf32>
    %267 = arith.addf %266, %265 : vector<8x128xf32>
    %268 = arith.divf %266, %267 : vector<8x128xf32>
    %269 = vector.extract_strided_slice %261 {offsets = [0, 128], sizes = [8, 128], strides = [1, 1]} : vector<8x512xf32> to vector<8x128xf32>
    %270 = arith.negf %269 : vector<8x128xf32>
    %271 = math.exp %270 : vector<8x128xf32>
    %cst_47 = arith.constant 1.000000e+00 : f32
    %272 = vector.broadcast %cst_47 : f32 to vector<8x128xf32>
    %273 = arith.addf %272, %271 : vector<8x128xf32>
    %274 = arith.divf %272, %273 : vector<8x128xf32>
    %275 = vector.extract_strided_slice %261 {offsets = [0, 256], sizes = [8, 128], strides = [1, 1]} : vector<8x512xf32> to vector<8x128xf32>
    %276 = math.tanh %275 : vector<8x128xf32>
    %277 = vector.extract_strided_slice %261 {offsets = [0, 384], sizes = [8, 128], strides = [1, 1]} : vector<8x512xf32> to vector<8x128xf32>
    %278 = arith.negf %277 : vector<8x128xf32>
    %279 = math.exp %278 : vector<8x128xf32>
    %cst_48 = arith.constant 1.000000e+00 : f32
    %280 = vector.broadcast %cst_48 : f32 to vector<8x128xf32>
    %281 = arith.addf %280, %279 : vector<8x128xf32>
    %282 = arith.divf %280, %281 : vector<8x128xf32>
    %283 = arith.mulf %274, %262 : vector<8x128xf32>
    %284 = arith.mulf %268, %276 : vector<8x128xf32>
    %285 = arith.addf %283, %284 : vector<8x128xf32>
    %286 = math.tanh %285 : vector<8x128xf32>
    %287 = arith.mulf %282, %286 : vector<8x128xf32>
    %cst_49 = arith.constant 0.000000e+00 : f32
    %288 = vector.broadcast %cst_49 : f32 to vector<8x128xf32>
    %289 = arith.maximumf %260, %288 : vector<8x128xf32>
    %cst_50 = arith.constant 0.000000e+00 : f32
    %290 = vector.broadcast %cst_50 : f32 to vector<8x128xf32>
    %291 = arith.maximumf %287, %290 : vector<8x128xf32>
    %c0_51 = arith.constant 0 : index
    %c0_52 = arith.constant 0 : index
    %292 = vector.load %arg4[%c0_51, %c0_52] : memref<128x128xf32, #tpu.memory_space<vmem>>, vector<128x128xf32>
    %cst_53 = arith.constant dense<0.000000e+00> : vector<8x128xf32>
    %293 = tpu.matmul %289, %292, %cst_53 {dimension_numbers = #tpu.dot_dimension_numbers<[1], [0], [0], [1], [0, 0, 1, 1], [], []>} : vector<8x128xf32>, vector<128x128xf32>, vector<8x128xf32> -> vector<8x128xf32>
    %c0_54 = arith.constant 0 : index
    %c0_55 = arith.constant 0 : index
    %294 = vector.load %arg5[%c0_54, %c0_55] : memref<128x128xf32, #tpu.memory_space<vmem>>, vector<128x128xf32>
    %cst_56 = arith.constant dense<0.000000e+00> : vector<8x128xf32>
    %295 = tpu.matmul %291, %294, %cst_56 {dimension_numbers = #tpu.dot_dimension_numbers<[1], [0], [0], [1], [0, 0, 1, 1], [], []>} : vector<8x128xf32>, vector<128x128xf32>, vector<8x128xf32> -> vector<8x128xf32>
    %296 = arith.addf %293, %295 : vector<8x128xf32>
    %c0_57 = arith.constant 0 : index
    %c0_58 = arith.constant 0 : index
    %297 = vector.load %arg6[%c0_57, %c0_58] : memref<1x128xf32, #tpu.memory_space<vmem>>, vector<1x128xf32>
    %298 = vector.broadcast %297 : vector<1x128xf32> to vector<8x128xf32>
    %299 = arith.addf %296, %298 : vector<8x128xf32>
    %c0_59 = arith.constant 0 : index
    %c0_60 = arith.constant 0 : index
    %300 = vector.load %arg7[%c0_59, %c0_60] : memref<8x128xf32, #tpu.memory_space<vmem>>, vector<8x128xf32>
    tpu.vector_store %arg7[%c0_59, %c0_60], %299 {strides = array<i32>} : memref<8x128xf32, #tpu.memory_space<vmem>>, vector<8x128xf32>,
    return
  }
}

</mosaic_0001>

<llo_original>
// kernel: tpu_custom_call.1
$region0: #{tpu_custom_call.1}
  #allocation0 [shape = 'u32[]', space=smem, size = 0x4, offset = 0x4, fixed_abs, tag = 'smem constant byte address 0x4 - core index']
  #allocation1 [shape = 'u32[72,128]{1,0:T(1,128)}', space=vmem, size = 0x9000, scoped, tag = 'internal scratch']
  %s0 = inlined_call_operand.vmem [shape: f32[72,32], index: 0, kind: input, shape index: {}]
  %s1 = inlined_call_operand.hbm [shape: f32[32,1024], index: 1, kind: input, shape index: {}]
  %s2 = inlined_call_operand.vmem [shape: f32[1,1024], index: 2, kind: input, shape index: {}]
  %s3 = inlined_call_operand.hbm [shape: f32[128,512], index: 3, kind: input, shape index: {}]
  %s4 = inlined_call_operand.hbm [shape: f32[128,128], index: 4, kind: input, shape index: {}]
  %s5 = inlined_call_operand.hbm [shape: f32[128,128], index: 5, kind: input, shape index: {}]
  %s6 = inlined_call_operand.vmem [shape: f32[1,128], index: 6, kind: input, shape index: {}]
  %s7 = inlined_call_operand.hbm [shape: f32[8,128], index: 7, kind: output, shape index: {}]
  %s8 = sld [smem:[#allocation0]]
  $region54: #{tpu_custom_call.1} parent=0
    _
  %s10 = ssub.s32 1, %s8
  %s11 = scalar_select 0, %s10, %s8
  $region1: #{tpu_custom_call.1} parent=0
    #allocation2 [shape = 'u8[131072]{0}', space=vmem, size = 0x20000, scoped, tag = 'input window, operand 1, single buffered']
    #allocation3 [shape = 's32[1]{0}', space=sflag, size = 0x4, scoped, tag = 'scoped memory for tpu_custom_call.1']
    #allocation4 [shape = 's32[1]{0}', space=sflag, size = 0x4, scoped, tag = 'scoped memory for tpu_custom_call.1']
    #allocation5 [shape = 'u8[262144]{0}', space=vmem, size = 0x40000, scoped, tag = 'input window, operand 3, single buffered']
    #allocation6 [shape = 's32[1]{0}', space=sflag, size = 0x4, scoped, tag = 'scoped memory for tpu_custom_call.1']
    #allocation7 [shape = 'u8[65536]{0}', space=vmem, size = 0x10000, scoped, tag = 'input window, operand 4, single buffered']
    #allocation8 [shape = 'u8[65536]{0}', space=vmem, size = 0x10000, scoped, tag = 'input window, operand 5, single buffered']
    #allocation9 [shape = 's32[1]{0}', space=sflag, size = 0x4, scoped, tag = 'scoped memory for tpu_custom_call.1']
    #allocation10 [shape = 'u8[4096]{0}', space=vmem, size = 0x1000, scoped, tag = 'output window, operand 0, single buffered']
    %12 = vsyncpa [#allocation3], 0
    %13 = vsyncpa [#allocation6], 0
    %14 = vsyncpa [#allocation9], 0
    %15 = vsyncpa [#allocation4], 0
    // Predicated region
    $region2: #{tpu_custom_call.1} parent=1 // pred_check
      _
    $region3: #{tpu_custom_call.1} parent=1 // pred_check_branch
      %17 = sbr.rel (0) target = $region5
    $region4: #{tpu_custom_call.1} parent=1 // pred_region
      _
    $region5: #{tpu_custom_call.1} parent=1 // pred_fallthru
      _
    // Predicated region
    $region6: #{tpu_custom_call.1} parent=1 // pred_check
      _
    $region7: #{tpu_custom_call.1} parent=1 // pred_check_branch
      %19 = sbr.rel (0) target = $region9
    $region8: #{tpu_custom_call.1} parent=1 // pred_region
      %21 = vsyncadd [#allocation3], 0
      %s22 = sshll.u32 %s1, 4
      %s23 = int_to_ptr.hbm [resolvable:$true] %s22
      %s24 = sshll.u32 [#allocation2], 4
      %s25 = int_to_ptr.vmem [resolvable:$true] %s24
      %30 = dma.hbm_to_vmem [thread:$0]  %s23, 4096, %s25, [#allocation3], 1024, 1024, 64
    $region9: #{tpu_custom_call.1} parent=1 // pred_fallthru
      _
    // Predicated region
    $region10: #{tpu_custom_call.1} parent=1 // pred_check
      _
    $region11: #{tpu_custom_call.1} parent=1 // pred_check_branch
      %32 = sbr.rel (0) target = $region13
    $region12: #{tpu_custom_call.1} parent=1 // pred_region
      _
    $region13: #{tpu_custom_call.1} parent=1 // pred_fallthru
      _
    // Predicated region
    $region14: #{tpu_custom_call.1} parent=1 // pred_check
      _
    $region15: #{tpu_custom_call.1} parent=1 // pred_check_branch
      %34 = sbr.rel (0) target = $region17
    $region16: #{tpu_custom_call.1} parent=1 // pred_region
      %36 = vsyncadd [#allocation6], 0
      %s37 = sshll.u32 %s3, 4
      %s38 = int_to_ptr.hbm [resolvable:$true] %s37
      %s39 = sshll.u32 [#allocation5], 4
      %s40 = int_to_ptr.vmem [resolvable:$true] %s39
      %45 = dma.hbm_to_vmem [thread:$0]  %s38, 8192, %s40, [#allocation6], 512, 512, 32
    $region17: #{tpu_custom_call.1} parent=1 // pred_fallthru
      _
    // Predicated region
    $region18: #{tpu_custom_call.1} parent=1 // pred_check
      _
    $region19: #{tpu_custom_call.1} parent=1 // pred_check_branch
      %47 = sbr.rel (0) target = $region21
    $region20: #{tpu_custom_call.1} parent=1 // pred_region
      %49 = vsyncadd [#allocation6], 0
      %s50 = sshll.u32 %s4, 4
      %s51 = int_to_ptr.hbm [resolvable:$true] %s50
      %s52 = sshll.u32 [#allocation7], 4
      %s53 = int_to_ptr.vmem [resolvable:$true] %s52
      %58 = dma.hbm_to_vmem [thread:$0]  %s51, 2048, %s53, [#allocation6], 128, 128, 8
    $region21: #{tpu_custom_call.1} parent=1 // pred_fallthru
      _
    // Predicated region
    $region22: #{tpu_custom_call.1} parent=1 // pred_check
      _
    $region23: #{tpu_custom_call.1} parent=1 // pred_check_branch
      %60 = sbr.rel (0) target = $region25
    $region24: #{tpu_custom_call.1} parent=1 // pred_region
      %62 = vsyncadd [#allocation9], 0
      %s63 = sshll.u32 %s5, 4
      %s64 = int_to_ptr.hbm [resolvable:$true] %s63
      %s65 = sshll.u32 [#allocation8], 4
      %s66 = int_to_ptr.vmem [resolvable:$true] %s65
      %71 = dma.hbm_to_vmem [thread:$0]  %s64, 2048, %s66, [#allocation9], 128, 128, 8
    $region25: #{tpu_custom_call.1} parent=1 // pred_fallthru
      _
    // Predicated region
    $region26: #{tpu_custom_call.1} parent=1 // pred_check
      _
    $region27: #{tpu_custom_call.1} parent=1 // pred_check_branch
      %73 = sbr.rel (0) target = $region29
    $region28: #{tpu_custom_call.1} parent=1 // pred_region
      _
    $region29: #{tpu_custom_call.1} parent=1 // pred_fallthru
      _
    // Predicated region
    $region30: #{tpu_custom_call.1} parent=1 // pred_check
      _
    $region31: #{tpu_custom_call.1} parent=1 // pred_check_branch
      %75 = sbr.rel (0) target = $region33
    $region32: #{tpu_custom_call.1} parent=1 // pred_region
      %77 = dma.done [#allocation3], 4096
    $region33: #{tpu_custom_call.1} parent=1 // pred_fallthru
      _
    // Predicated region
    $region34: #{tpu_custom_call.1} parent=1 // pred_check
      _
    $region35: #{tpu_custom_call.1} parent=1 // pred_check_branch
      %79 = sbr.rel (0) target = $region37
    $region36: #{tpu_custom_call.1} parent=1 // pred_region
      %81 = dma.done [#allocation6], 8192
    $region37: #{tpu_custom_call.1} parent=1 // pred_fallthru
      _
    // Predicated region
    $region38: #{tpu_custom_call.1} parent=1 // pred_check
      _
    $region39: #{tpu_custom_call.1} parent=1 // pred_check_branch
      %83 = sbr.rel (0) target = $region41
    $region40: #{tpu_custom_call.1} parent=1 // pred_region
      %85 = dma.done [#allocation6], 2048
    $region41: #{tpu_custom_call.1} parent=1 // pred_fallthru
      _
    // Predicated region
    $region42: #{tpu_custom_call.1} parent=1 // pred_check
      _
    $region43: #{tpu_custom_call.1} parent=1 // pred_check_branch
      %87 = sbr.rel (0) target = $region45
    $region44: #{tpu_custom_call.1} parent=1 // pred_region
      %89 = dma.done [#allocation9], 2048
    $region45: #{tpu_custom_call.1} parent=1 // pred_fallthru
      _
    %v90 = vld [vmem:[%s0] sm:$0xff]
    %v91 = vld [vmem:[%s0 + $0x8] sm:$0xff]
    %v92 = vld [vmem:[%s0 + $0x10] sm:$0xff]
    %v93 = vld [vmem:[%s0 + $0x18] sm:$0xff]
    %v94 = vld [vmem:[%s0 + $0x20] sm:$0xff]
    %v95 = vld [vmem:[%s0 + $0x28] sm:$0xff]
    %v96 = vld [vmem:[%s0 + $0x30] sm:$0xff]
    %v97 = vld [vmem:[%s0 + $0x38] sm:$0xff]
    %v98 = vld [vmem:[%s0 + $0x40] sm:$0xff]
    %v99 = vld [vmem:[#allocation2] sm:$0xff]
    %v100 = vld [vmem:[#allocation2 + $0x8] sm:$0xff]
    %v101 = vld [vmem:[#allocation2 + $0x10] sm:$0xff]
    %v102 = vld [vmem:[#allocation2 + $0x18] sm:$0xff]
    %v103 = vld [vmem:[#allocation2 + $0x20] sm:$0xff]
    %v104 = vld [vmem:[#allocation2 + $0x28] sm:$0xff]
    %v105 = vld [vmem:[#allocation2 + $0x30] sm:$0xff]
    %v106 = vld [vmem:[#allocation2 + $0x38] sm:$0xff]
    %v107 = vld [vmem:[#allocation2 + $0x40] sm:$0xff]
    %v108 = vld [vmem:[#allocation2 + $0x48] sm:$0xff]
    %v109 = vld [vmem:[#allocation2 + $0x50] sm:$0xff]
    %v110 = vld [vmem:[#allocation2 + $0x58] sm:$0xff]
    %v111 = vld [vmem:[#allocation2 + $0x60] sm:$0xff]
    %v112 = vld [vmem:[#allocation2 + $0x68] sm:$0xff]
    %v113 = vld [vmem:[#allocation2 + $0x70] sm:$0xff]
    %v114 = vld [vmem:[#allocation2 + $0x78] sm:$0xff]
    %v115 = vld [vmem:[#allocation2 + $0x80] sm:$0xff]
    %v116 = vld [vmem:[#allocation2 + $0x88] sm:$0xff]
    %v117 = vld [vmem:[#allocation2 + $0x90] sm:$0xff]
    %v118 = vld [vmem:[#allocation2 + $0x98] sm:$0xff]
    %v119 = vld [vmem:[#allocation2 + $0xa0] sm:$0xff]
    %v120 = vld [vmem:[#allocation2 + $0xa8] sm:$0xff]
    %v121 = vld [vmem:[#allocation2 + $0xb0] sm:$0xff]
    %v122 = vld [vmem:[#allocation2 + $0xb8] sm:$0xff]
    %v123 = vld [vmem:[#allocation2 + $0xc0] sm:$0xff]
    %v124 = vld [vmem:[#allocation2 + $0xc8] sm:$0xff]
    %v125 = vld [vmem:[#allocation2 + $0xd0] sm:$0xff]
    %v126 = vld [vmem:[#allocation2 + $0xd8] sm:$0xff]
    %v127 = vld [vmem:[#allocation2 + $0xe0] sm:$0xff]
    %v128 = vld [vmem:[#allocation2 + $0xe8] sm:$0xff]
    %v129 = vld [vmem:[#allocation2 + $0xf0] sm:$0xff]
    %v130 = vld [vmem:[#allocation2 + $0xf8] sm:$0xff]
    %v131 = vld [vmem:[%s2] sm:$0xff]
    %v133 = vperm.slane %v131, 0
    %v134 = vperm.slane %v131, 1
    %v135 = vperm.slane %v131, 2
    %v136 = vperm.slane %v131, 3
    %v137 = vperm.slane %v131, 4
    %v138 = vperm.slane %v131, 5
    %v139 = vperm.slane %v131, 6
    %v140 = vperm.slane %v131, 7
    %vm149 = vcmask 261120
    %v151 = vsel %vm149, %v90, 0
    %v154 = vsel %vm149, %v91, 0
    %v157 = vsel %vm149, %v92, 0
    %v160 = vsel %vm149, %v93, 0
    %v163 = vsel %vm149, %v94, 0
    %v166 = vsel %vm149, %v95, 0
    %v169 = vsel %vm149, %v96, 0
    %v172 = vsel %vm149, %v97, 0
    %v175 = vsel %vm149, %v98, 0
    %177 = vmatpush.msra.mxu0 0.0
    %178 = vmatpush.msra.mxu0 0.0
    %179 = vmatpush.msra.mxu0 0.0
    %180 = vmatpush.msra.mxu0 0.0
    %181 = vmatpush.msra.mxu0 0.0
    %182 = vmatpush.msra.mxu0 0.0
    %183 = vmatpush.msra.mxu0 0.0
    %184 = vmatpush.msra.mxu0 0.0
    %185 = vmatpush.msra.mxu0 0.0
    %186 = vmatpush.msra.mxu0 0.0
    %187 = vmatpush.msra.mxu0 0.0
    %188 = vmatpush.msra.mxu0 0.0
    %189 = vmatpush.msra.mxu0 %v123
    %190 = vmatpush.msra.mxu0 %v115
    %191 = vmatpush.msra.mxu0 %v107
    %192 = vmatpush.msra.mxu0 %v99
    %193 = vmatmul.f32.gmra.mxu0 %v151
    %v194 = vpop.f32.mrf.mxu0
    %v195 = vadd.f32 %v133, %v194
    %196 = vmatmul.f32.gmra.mxu0 %v154
    %v197 = vpop.f32.mrf.mxu0
    %v198 = vadd.f32 %v133, %v197
    %199 = vmatmul.f32.gmra.mxu0 %v157
    %v200 = vpop.f32.mrf.mxu0
    %v201 = vadd.f32 %v133, %v200
    %202 = vmatmul.f32.gmra.mxu0 %v160
    %v203 = vpop.f32.mrf.mxu0
    %v204 = vadd.f32 %v133, %v203
    %205 = vmatmul.f32.gmra.mxu0 %v163
    %v206 = vpop.f32.mrf.mxu0
    %v207 = vadd.f32 %v133, %v206
    %208 = vmatmul.f32.gmra.mxu0 %v166
    %v209 = vpop.f32.mrf.mxu0
    %v210 = vadd.f32 %v133, %v209
    %211 = vmatmul.f32.gmra.mxu0 %v169
    %v212 = vpop.f32.mrf.mxu0
    %v213 = vadd.f32 %v133, %v212
    %214 = vmatmul.f32.gmra.mxu0 %v172
    %v215 = vpop.f32.mrf.mxu0
    %v216 = vadd.f32 %v133, %v215
    %217 = vmatmul.f32.gmra.mxu0 %v175
    %v218 = vpop.f32.mrf.mxu0
    %v219 = vadd.f32 %v133, %v218
    %220 = vdwg.mxu0
    %221 = vmatpush.msra.mxu0 0.0
    %222 = vmatpush.msra.mxu0 0.0
    %223 = vmatpush.msra.mxu0 0.0
    %224 = vmatpush.msra.mxu0 0.0
    %225 = vmatpush.msra.mxu0 0.0
    %226 = vmatpush.msra.mxu0 0.0
    %227 = vmatpush.msra.mxu0 0.0
    %228 = vmatpush.msra.mxu0 0.0
    %229 = vmatpush.msra.mxu0 0.0
    %230 = vmatpush.msra.mxu0 0.0
    %231 = vmatpush.msra.mxu0 0.0
    %232 = vmatpush.msra.mxu0 0.0
    %233 = vmatpush.msra.mxu0 %v124
    %234 = vmatpush.msra.mxu0 %v116
    %235 = vmatpush.msra.mxu0 %v108
    %236 = vmatpush.msra.mxu0 %v100
    %237 = vmatmul.f32.gmra.mxu0 %v151
    %v238 = vpop.f32.mrf.mxu0
    %v239 = vadd.f32 %v134, %v238
    %240 = vmatmul.f32.gmra.mxu0 %v154
    %v241 = vpop.f32.mrf.mxu0
    %v242 = vadd.f32 %v134, %v241
    %243 = vmatmul.f32.gmra.mxu0 %v157
    %v244 = vpop.f32.mrf.mxu0
    %v245 = vadd.f32 %v134, %v244
    %246 = vmatmul.f32.gmra.mxu0 %v160
    %v247 = vpop.f32.mrf.mxu0
    %v248 = vadd.f32 %v134, %v247
    %249 = vmatmul.f32.gmra.mxu0 %v163
    %v250 = vpop.f32.mrf.mxu0
    %v251 = vadd.f32 %v134, %v250
    %252 = vmatmul.f32.gmra.mxu0 %v166
    %v253 = vpop.f32.mrf.mxu0
    %v254 = vadd.f32 %v134, %v253
    %255 = vmatmul.f32.gmra.mxu0 %v169
    %v256 = vpop.f32.mrf.mxu0
    %v257 = vadd.f32 %v134, %v256
    %258 = vmatmul.f32.gmra.mxu0 %v172
    %v259 = vpop.f32.mrf.mxu0
    %v260 = vadd.f32 %v134, %v259
    %261 = vmatmul.f32.gmra.mxu0 %v175
    %v262 = vpop.f32.mrf.mxu0
    %v263 = vadd.f32 %v134, %v262
    %264 = vdwg.mxu0
    %265 = vmatpush.msra.mxu0 0.0
    %266 = vmatpush.msra.mxu0 0.0
    %267 = vmatpush.msra.mxu0 0.0
    %268 = vmatpush.msra.mxu0 0.0
    %269 = vmatpush.msra.mxu0 0.0
    %270 = vmatpush.msra.mxu0 0.0
    %271 = vmatpush.msra.mxu0 0.0
    %272 = vmatpush.msra.mxu0 0.0
    %273 = vmatpush.msra.mxu0 0.0
    %274 = vmatpush.msra.mxu0 0.0
    %275 = vmatpush.msra.mxu0 0.0
    %276 = vmatpush.msra.mxu0 0.0
    %277 = vmatpush.msra.mxu0 %v125
    %278 = vmatpush.msra.mxu0 %v117
    %279 = vmatpush.msra.mxu0 %v109
    %280 = vmatpush.msra.mxu0 %v101
    %281 = vmatmul.f32.gmra.mxu0 %v151
    %v282 = vpop.f32.mrf.mxu0
    %v283 = vadd.f32 %v135, %v282
    %284 = vmatmul.f32.gmra.mxu0 %v154
    %v285 = vpop.f32.mrf.mxu0
    %v286 = vadd.f32 %v135, %v285
    %287 = vmatmul.f32.gmra.mxu0 %v157
    %v288 = vpop.f32.mrf.mxu0
    %v289 = vadd.f32 %v135, %v288
    %290 = vmatmul.f32.gmra.mxu0 %v160
    %v291 = vpop.f32.mrf.mxu0
    %v292 = vadd.f32 %v135, %v291
    %293 = vmatmul.f32.gmra.mxu0 %v163
    %v294 = vpop.f32.mrf.mxu0
    %v295 = vadd.f32 %v135, %v294
    %296 = vmatmul.f32.gmra.mxu0 %v166
    %v297 = vpop.f32.mrf.mxu0
    %v298 = vadd.f32 %v135, %v297
    %299 = vmatmul.f32.gmra.mxu0 %v169
    %v300 = vpop.f32.mrf.mxu0
    %v301 = vadd.f32 %v135, %v300
    %302 = vmatmul.f32.gmra.mxu0 %v172
    %v303 = vpop.f32.mrf.mxu0
    %v304 = vadd.f32 %v135, %v303
    %305 = vmatmul.f32.gmra.mxu0 %v175
    %v306 = vpop.f32.mrf.mxu0
    %v307 = vadd.f32 %v135, %v306
    %308 = vdwg.mxu0
    %309 = vmatpush.msra.mxu0 0.0
    %310 = vmatpush.msra.mxu0 0.0
    %311 = vmatpush.msra.mxu0 0.0
    %312 = vmatpush.msra.mxu0 0.0
    %313 = vmatpush.msra.mxu0 0.0
    %314 = vmatpush.msra.mxu0 0.0
    %315 = vmatpush.msra.mxu0 0.0
    %316 = vmatpush.msra.mxu0 0.0
    %317 = vmatpush.msra.mxu0 0.0
    %318 = vmatpush.msra.mxu0 0.0
    %319 = vmatpush.msra.mxu0 0.0
    %320 = vmatpush.msra.mxu0 0.0
    %321 = vmatpush.msra.mxu0 %v126
    %322 = vmatpush.msra.mxu0 %v118
    %323 = vmatpush.msra.mxu0 %v110
    %324 = vmatpush.msra.mxu0 %v102
    %325 = vmatmul.f32.gmra.mxu0 %v151
    %v326 = vpop.f32.mrf.mxu0
    %v327 = vadd.f32 %v136, %v326
    %328 = vmatmul.f32.gmra.mxu0 %v154
    %v329 = vpop.f32.mrf.mxu0
    %v330 = vadd.f32 %v136, %v329
    %331 = vmatmul.f32.gmra.mxu0 %v157
    %v332 = vpop.f32.mrf.mxu0
    %v333 = vadd.f32 %v136, %v332
    %334 = vmatmul.f32.gmra.mxu0 %v160
    %v335 = vpop.f32.mrf.mxu0
    %v336 = vadd.f32 %v136, %v335
    %337 = vmatmul.f32.gmra.mxu0 %v163
    %v338 = vpop.f32.mrf.mxu0
    %v339 = vadd.f32 %v136, %v338
    %340 = vmatmul.f32.gmra.mxu0 %v166
    %v341 = vpop.f32.mrf.mxu0
    %v342 = vadd.f32 %v136, %v341
    %343 = vmatmul.f32.gmra.mxu0 %v169
    %v344 = vpop.f32.mrf.mxu0
    %v345 = vadd.f32 %v136, %v344
    %346 = vmatmul.f32.gmra.mxu0 %v172
    %v347 = vpop.f32.mrf.mxu0
    %v348 = vadd.f32 %v136, %v347
    %349 = vmatmul.f32.gmra.mxu0 %v175
    %v350 = vpop.f32.mrf.mxu0
    %v351 = vadd.f32 %v136, %v350
    %352 = vdwg.mxu0
    %353 = vmatpush.msra.mxu0 0.0
    %354 = vmatpush.msra.mxu0 0.0
    %355 = vmatpush.msra.mxu0 0.0
    %356 = vmatpush.msra.mxu0 0.0
    %357 = vmatpush.msra.mxu0 0.0
    %358 = vmatpush.msra.mxu0 0.0
    %359 = vmatpush.msra.mxu0 0.0
    %360 = vmatpush.msra.mxu0 0.0
    %361 = vmatpush.msra.mxu0 0.0
    %362 = vmatpush.msra.mxu0 0.0
    %363 = vmatpush.msra.mxu0 0.0
    %364 = vmatpush.msra.mxu0 0.0
    %365 = vmatpush.msra.mxu0 %v127
    %366 = vmatpush.msra.mxu0 %v119
    %367 = vmatpush.msra.mxu0 %v111
    %368 = vmatpush.msra.mxu0 %v103
    %369 = vmatmul.f32.gmra.mxu0 %v151
    %v370 = vpop.f32.mrf.mxu0
    %371 = vmatmul.f32.gmra.mxu0 %v154
    %v372 = vpop.f32.mrf.mxu0
    %373 = vmatmul.f32.gmra.mxu0 %v157
    %v374 = vpop.f32.mrf.mxu0
    %375 = vmatmul.f32.gmra.mxu0 %v160
    %v376 = vpop.f32.mrf.mxu0
    %377 = vmatmul.f32.gmra.mxu0 %v163
    %v378 = vpop.f32.mrf.mxu0
    %379 = vmatmul.f32.gmra.mxu0 %v166
    %v380 = vpop.f32.mrf.mxu0
    %381 = vmatmul.f32.gmra.mxu0 %v169
    %v382 = vpop.f32.mrf.mxu0
    %383 = vmatmul.f32.gmra.mxu0 %v172
    %v384 = vpop.f32.mrf.mxu0
    %385 = vmatmul.f32.gmra.mxu0 %v175
    %v386 = vpop.f32.mrf.mxu0
    %v387 = vadd.f32 %v137, %v386
    %388 = vdwg.mxu0
    %389 = vmatpush.msra.mxu0 0.0
    %390 = vmatpush.msra.mxu0 0.0
    %391 = vmatpush.msra.mxu0 0.0
    %392 = vmatpush.msra.mxu0 0.0
    %393 = vmatpush.msra.mxu0 0.0
    %394 = vmatpush.msra.mxu0 0.0
    %395 = vmatpush.msra.mxu0 0.0
    %396 = vmatpush.msra.mxu0 0.0
    %397 = vmatpush.msra.mxu0 0.0
    %398 = vmatpush.msra.mxu0 0.0
    %399 = vmatpush.msra.mxu0 0.0
    %400 = vmatpush.msra.mxu0 0.0
    %401 = vmatpush.msra.mxu0 %v128
    %402 = vmatpush.msra.mxu0 %v120
    %403 = vmatpush.msra.mxu0 %v112
    %404 = vmatpush.msra.mxu0 %v104
    %405 = vmatmul.f32.gmra.mxu0 %v151
    %v406 = vpop.f32.mrf.mxu0
    %407 = vmatmul.f32.gmra.mxu0 %v154
    %v408 = vpop.f32.mrf.mxu0
    %409 = vmatmul.f32.gmra.mxu0 %v157
    %v410 = vpop.f32.mrf.mxu0
    %411 = vmatmul.f32.gmra.mxu0 %v160
    %v412 = vpop.f32.mrf.mxu0
    %413 = vmatmul.f32.gmra.mxu0 %v163
    %v414 = vpop.f32.mrf.mxu0
    %415 = vmatmul.f32.gmra.mxu0 %v166
    %v416 = vpop.f32.mrf.mxu0
    %417 = vmatmul.f32.gmra.mxu0 %v169
    %v418 = vpop.f32.mrf.mxu0
    %419 = vmatmul.f32.gmra.mxu0 %v172
    %v420 = vpop.f32.mrf.mxu0
    %421 = vmatmul.f32.gmra.mxu0 %v175
    %v422 = vpop.f32.mrf.mxu0
    %v423 = vadd.f32 %v138, %v422
    %424 = vdwg.mxu0
    %425 = vmatpush.msra.mxu0 0.0
    %426 = vmatpush.msra.mxu0 0.0
    %427 = vmatpush.msra.mxu0 0.0
    %428 = vmatpush.msra.mxu0 0.0
    %429 = vmatpush.msra.mxu0 0.0
    %430 = vmatpush.msra.mxu0 0.0
    %431 = vmatpush.msra.mxu0 0.0
    %432 = vmatpush.msra.mxu0 0.0
    %433 = vmatpush.msra.mxu0 0.0
    %434 = vmatpush.msra.mxu0 0.0
    %435 = vmatpush.msra.mxu0 0.0
    %436 = vmatpush.msra.mxu0 0.0
    %437 = vmatpush.msra.mxu0 %v129
    %438 = vmatpush.msra.mxu0 %v121
    %439 = vmatpush.msra.mxu0 %v113
    %440 = vmatpush.msra.mxu0 %v105
    %441 = vmatmul.f32.gmra.mxu0 %v151
    %v442 = vpop.f32.mrf.mxu0
    %443 = vmatmul.f32.gmra.mxu0 %v154
    %v444 = vpop.f32.mrf.mxu0
    %445 = vmatmul.f32.gmra.mxu0 %v157
    %v446 = vpop.f32.mrf.mxu0
    %447 = vmatmul.f32.gmra.mxu0 %v160
    %v448 = vpop.f32.mrf.mxu0
    %449 = vmatmul.f32.gmra.mxu0 %v163
    %v450 = vpop.f32.mrf.mxu0
    %451 = vmatmul.f32.gmra.mxu0 %v166
    %v452 = vpop.f32.mrf.mxu0
    %453 = vmatmul.f32.gmra.mxu0 %v169
    %v454 = vpop.f32.mrf.mxu0
    %455 = vmatmul.f32.gmra.mxu0 %v172
    %v456 = vpop.f32.mrf.mxu0
    %457 = vmatmul.f32.gmra.mxu0 %v175
    %v458 = vpop.f32.mrf.mxu0
    %v459 = vadd.f32 %v139, %v458
    %460 = vdwg.mxu0
    %461 = vmatpush.msra.mxu0 0.0
    %462 = vmatpush.msra.mxu0 0.0
    %463 = vmatpush.msra.mxu0 0.0
    %464 = vmatpush.msra.mxu0 0.0
    %465 = vmatpush.msra.mxu0 0.0
    %466 = vmatpush.msra.mxu0 0.0
    %467 = vmatpush.msra.mxu0 0.0
    %468 = vmatpush.msra.mxu0 0.0
    %469 = vmatpush.msra.mxu0 0.0
    %470 = vmatpush.msra.mxu0 0.0
    %471 = vmatpush.msra.mxu0 0.0
    %472 = vmatpush.msra.mxu0 0.0
    %473 = vmatpush.msra.mxu0 %v130
    %474 = vmatpush.msra.mxu0 %v122
    %475 = vmatpush.msra.mxu0 %v114
    %476 = vmatpush.msra.mxu0 %v106
    %477 = vmatmul.f32.gmra.mxu0 %v151
    %v478 = vpop.f32.mrf.mxu0
    %479 = vmatmul.f32.gmra.mxu0 %v154
    %v480 = vpop.f32.mrf.mxu0
    %481 = vmatmul.f32.gmra.mxu0 %v157
    %v482 = vpop.f32.mrf.mxu0
    %483 = vmatmul.f32.gmra.mxu0 %v160
    %v484 = vpop.f32.mrf.mxu0
    %485 = vmatmul.f32.gmra.mxu0 %v163
    %v486 = vpop.f32.mrf.mxu0
    %487 = vmatmul.f32.gmra.mxu0 %v166
    %v488 = vpop.f32.mrf.mxu0
    %489 = vmatmul.f32.gmra.mxu0 %v169
    %v490 = vpop.f32.mrf.mxu0
    %491 = vmatmul.f32.gmra.mxu0 %v172
    %v492 = vpop.f32.mrf.mxu0
    %493 = vmatmul.f32.gmra.mxu0 %v175
    %v494 = vpop.f32.mrf.mxu0
    %v495 = vadd.f32 %v140, %v494
    %496 = vdwg.mxu0
    %v497 = vld [vmem:[#allocation5] sm:$0xff]
    %v498 = vld [vmem:[#allocation5 + $0x8] sm:$0xff]
    %v499 = vld [vmem:[#allocation5 + $0x10] sm:$0xff]
    %v500 = vld [vmem:[#allocation5 + $0x18] sm:$0xff]
    %v501 = vld [vmem:[#allocation5 + $0x20] sm:$0xff]
    %v502 = vld [vmem:[#allocation5 + $0x28] sm:$0xff]
    %v503 = vld [vmem:[#allocation5 + $0x30] sm:$0xff]
    %v504 = vld [vmem:[#allocation5 + $0x38] sm:$0xff]
    %v505 = vld [vmem:[#allocation5 + $0x40] sm:$0xff]
    %v506 = vld [vmem:[#allocation5 + $0x48] sm:$0xff]
    %v507 = vld [vmem:[#allocation5 + $0x50] sm:$0xff]
    %v508 = vld [vmem:[#allocation5 + $0x58] sm:$0xff]
    %v509 = vld [vmem:[#allocation5 + $0x60] sm:$0xff]
    %v510 = vld [vmem:[#allocation5 + $0x68] sm:$0xff]
    %v511 = vld [vmem:[#allocation5 + $0x70] sm:$0xff]
    %v512 = vld [vmem:[#allocation5 + $0x78] sm:$0xff]
    %v513 = vld [vmem:[#allocation5 + $0x80] sm:$0xff]
    %v514 = vld [vmem:[#allocation5 + $0x88] sm:$0xff]
    %v515 = vld [vmem:[#allocation5 + $0x90] sm:$0xff]
    %v516 = vld [vmem:[#allocation5 + $0x98] sm:$0xff]
    %v517 = vld [vmem:[#allocation5 + $0xa0] sm:$0xff]
    %v518 = vld [vmem:[#allocation5 + $0xa8] sm:$0xff]
    %v519 = vld [vmem:[#allocation5 + $0xb0] sm:$0xff]
    %v520 = vld [vmem:[#allocation5 + $0xb8] sm:$0xff]
    %v521 = vld [vmem:[#allocation5 + $0xc0] sm:$0xff]
    %v522 = vld [vmem:[#allocation5 + $0xc8] sm:$0xff]
    %v523 = vld [vmem:[#allocation5 + $0xd0] sm:$0xff]
    %v524 = vld [vmem:[#allocation5 + $0xd8] sm:$0xff]
    %v525 = vld [vmem:[#allocation5 + $0xe0] sm:$0xff]
    %v526 = vld [vmem:[#allocation5 + $0xe8] sm:$0xff]
    %v527 = vld [vmem:[#allocation5 + $0xf0] sm:$0xff]
    %v528 = vld [vmem:[#allocation5 + $0xf8] sm:$0xff]
    %v529 = vld [vmem:[#allocation5 + $0x100] sm:$0xff]
    %v530 = vld [vmem:[#allocation5 + $0x108] sm:$0xff]
    %v531 = vld [vmem:[#allocation5 + $0x110] sm:$0xff]
    %v532 = vld [vmem:[#allocation5 + $0x118] sm:$0xff]
    %v533 = vld [vmem:[#allocation5 + $0x120] sm:$0xff]
    %v534 = vld [vmem:[#allocation5 + $0x128] sm:$0xff]
    %v535 = vld [vmem:[#allocation5 + $0x130] sm:$0xff]
    %v536 = vld [vmem:[#allocation5 + $0x138] sm:$0xff]
    %v537 = vld [vmem:[#allocation5 + $0x140] sm:$0xff]
    %v538 = vld [vmem:[#allocation5 + $0x148] sm:$0xff]
    %v539 = vld [vmem:[#allocation5 + $0x150] sm:$0xff]
    %v540 = vld [vmem:[#allocation5 + $0x158] sm:$0xff]
    %v541 = vld [vmem:[#allocation5 + $0x160] sm:$0xff]
    %v542 = vld [vmem:[#allocation5 + $0x168] sm:$0xff]
    %v543 = vld [vmem:[#allocation5 + $0x170] sm:$0xff]
    %v544 = vld [vmem:[#allocation5 + $0x178] sm:$0xff]
    %v545 = vld [vmem:[#allocation5 + $0x180] sm:$0xff]
    %v546 = vld [vmem:[#allocation5 + $0x188] sm:$0xff]
    %v547 = vld [vmem:[#allocation5 + $0x190] sm:$0xff]
    %v548 = vld [vmem:[#allocation5 + $0x198] sm:$0xff]
    %v549 = vld [vmem:[#allocation5 + $0x1a0] sm:$0xff]
    %v550 = vld [vmem:[#allocation5 + $0x1a8] sm:$0xff]
    %v551 = vld [vmem:[#allocation5 + $0x1b0] sm:$0xff]
    %v552 = vld [vmem:[#allocation5 + $0x1b8] sm:$0xff]
    %v553 = vld [vmem:[#allocation5 + $0x1c0] sm:$0xff]
    %v554 = vld [vmem:[#allocation5 + $0x1c8] sm:$0xff]
    %v555 = vld [vmem:[#allocation5 + $0x1d0] sm:$0xff]
    %v556 = vld [vmem:[#allocation5 + $0x1d8] sm:$0xff]
    %v557 = vld [vmem:[#allocation5 + $0x1e0] sm:$0xff]
    %v558 = vld [vmem:[#allocation5 + $0x1e8] sm:$0xff]
    %v559 = vld [vmem:[#allocation5 + $0x1f0] sm:$0xff]
    %v560 = vld [vmem:[#allocation5 + $0x1f8] sm:$0xff]
    %561 = vmatpush.msra.mxu0 %v557
    %562 = vmatpush.msra.mxu0 %v553
    %563 = vmatpush.msra.mxu0 %v549
    %564 = vmatpush.msra.mxu0 %v545
    %565 = vmatpush.msra.mxu0 %v541
    %566 = vmatpush.msra.mxu0 %v537
    %567 = vmatpush.msra.mxu0 %v533
    %568 = vmatpush.msra.mxu0 %v529
    %569 = vmatpush.msra.mxu0 %v525
    %570 = vmatpush.msra.mxu0 %v521
    %571 = vmatpush.msra.mxu0 %v517
    %572 = vmatpush.msra.mxu0 %v513
    %573 = vmatpush.msra.mxu0 %v509
    %574 = vmatpush.msra.mxu0 %v505
    %575 = vmatpush.msra.mxu0 %v501
    %576 = vmatpush.msra.mxu0 %v497
    %577 = vmatmul.f32.gmra.mxu0 0.0
    %v578 = vpop.f32.mrf.mxu0
    %v579 = vadd.f32 0.0, %v578
    %580 = vdwg.mxu0
    %581 = vmatpush.msra.mxu0 %v558
    %582 = vmatpush.msra.mxu0 %v554
    %583 = vmatpush.msra.mxu0 %v550
    %584 = vmatpush.msra.mxu0 %v546
    %585 = vmatpush.msra.mxu0 %v542
    %586 = vmatpush.msra.mxu0 %v538
    %587 = vmatpush.msra.mxu0 %v534
    %588 = vmatpush.msra.mxu0 %v530
    %589 = vmatpush.msra.mxu0 %v526
    %590 = vmatpush.msra.mxu0 %v522
    %591 = vmatpush.msra.mxu0 %v518
    %592 = vmatpush.msra.mxu0 %v514
    %593 = vmatpush.msra.mxu0 %v510
    %594 = vmatpush.msra.mxu0 %v506
    %595 = vmatpush.msra.mxu0 %v502
    %596 = vmatpush.msra.mxu0 %v498
    %597 = vmatmul.f32.gmra.mxu0 0.0
    %v598 = vpop.f32.mrf.mxu0
    %v599 = vadd.f32 0.0, %v598
    %600 = vdwg.mxu0
    %601 = vmatpush.msra.mxu0 %v559
    %602 = vmatpush.msra.mxu0 %v555
    %603 = vmatpush.msra.mxu0 %v551
    %604 = vmatpush.msra.mxu0 %v547
    %605 = vmatpush.msra.mxu0 %v543
    %606 = vmatpush.msra.mxu0 %v539
    %607 = vmatpush.msra.mxu0 %v535
    %608 = vmatpush.msra.mxu0 %v531
    %609 = vmatpush.msra.mxu0 %v527
    %610 = vmatpush.msra.mxu0 %v523
    %611 = vmatpush.msra.mxu0 %v519
    %612 = vmatpush.msra.mxu0 %v515
    %613 = vmatpush.msra.mxu0 %v511
    %614 = vmatpush.msra.mxu0 %v507
    %615 = vmatpush.msra.mxu0 %v503
    %616 = vmatpush.msra.mxu0 %v499
    %617 = vmatmul.f32.gmra.mxu0 0.0
    %v618 = vpop.f32.mrf.mxu0
    %v619 = vadd.f32 0.0, %v618
    %620 = vdwg.mxu0
    %621 = vmatpush.msra.mxu0 %v560
    %622 = vmatpush.msra.mxu0 %v556
    %623 = vmatpush.msra.mxu0 %v552
    %624 = vmatpush.msra.mxu0 %v548
    %625 = vmatpush.msra.mxu0 %v544
    %626 = vmatpush.msra.mxu0 %v540
    %627 = vmatpush.msra.mxu0 %v536
    %628 = vmatpush.msra.mxu0 %v532
    %629 = vmatpush.msra.mxu0 %v528
    %630 = vmatpush.msra.mxu0 %v524
    %631 = vmatpush.msra.mxu0 %v520
    %632 = vmatpush.msra.mxu0 %v516
    %633 = vmatpush.msra.mxu0 %v512
    %634 = vmatpush.msra.mxu0 %v508
    %635 = vmatpush.msra.mxu0 %v504
    %636 = vmatpush.msra.mxu0 %v500
    %637 = vmatmul.f32.gmra.mxu0 0.0
    %v638 = vpop.f32.mrf.mxu0
    %v639 = vadd.f32 0.0, %v638
    %640 = vdwg.mxu0
    %v641 = vadd.f32 %v195, %v579
    %v642 = vadd.f32 %v239, %v599
    %v643 = vadd.f32 %v283, %v619
    %v644 = vadd.f32 %v327, %v639
    %v645 = vxor.u32 %v641, 2147483648
    %v646 = vmul.f32 %v645, 1.442695
    %v647 = vpow.pop %v646
    %v648 = vadd.f32 %v647, 1.0
    %v649 = vrcp.pop %v648
    %v650 = vmul.f32 %v648, %v649
    %v651 = vsub.f32 1.0, %v650
    %v652 = vmul.f32 %v649, %v651
    %v653 = vadd.f32 %v649, %v652
    %vm654 = vweird.f32 %v648
    %vm655 = vweird.f32 %v649
    %vm656 = vmor %vm654, %vm655
    %v657 = vsel %vm656, %v649, %v653
    %v658 = vand.u32 2147483647, %v648
    %vm659 = vcmp.eq.f32.partialorder %v658, 8.507059e+37
    %v660 = vand.u32 %v648, 2147483648
    %v661 = vor.u32 1.1754944e-38, %v660
    %v662 = vsel %vm659, %v661, %v657
    %v663 = vmul.f32 1.0, %v662
    %v664 = vxor.u32 %v642, 2147483648
    %v665 = vmul.f32 %v664, 1.442695
    %v666 = vpow.pop %v665
    %v667 = vadd.f32 %v666, 1.0
    %v668 = vrcp.pop %v667
    %v669 = vmul.f32 %v667, %v668
    %v670 = vsub.f32 1.0, %v669
    %v671 = vmul.f32 %v668, %v670
    %v672 = vadd.f32 %v668, %v671
    %vm673 = vweird.f32 %v667
    %vm674 = vweird.f32 %v668
    %vm675 = vmor %vm673, %vm674
    %v676 = vsel %vm675, %v668, %v672
    %v677 = vand.u32 2147483647, %v667
    %vm678 = vcmp.eq.f32.partialorder %v677, 8.507059e+37
    %v679 = vand.u32 %v667, 2147483648
    %v680 = vor.u32 1.1754944e-38, %v679
    %v681 = vsel %vm678, %v680, %v676
    %v682 = vmul.f32 1.0, %v681
    %v683 = vtanh.pop %v643
    %v684 = vxor.u32 %v644, 2147483648
    %v685 = vmul.f32 %v684, 1.442695
    %v686 = vpow.pop %v685
    %v687 = vadd.f32 %v686, 1.0
    %v688 = vrcp.pop %v687
    %v689 = vmul.f32 %v687, %v688
    %v690 = vsub.f32 1.0, %v689
    %v691 = vmul.f32 %v688, %v690
    %v692 = vadd.f32 %v688, %v691
    %vm693 = vweird.f32 %v687
    %vm694 = vweird.f32 %v688
    %vm695 = vmor %vm693, %vm694
    %v696 = vsel %vm695, %v688, %v692
    %v697 = vand.u32 2147483647, %v687
    %vm698 = vcmp.eq.f32.partialorder %v697, 8.507059e+37
    %v699 = vand.u32 %v687, 2147483648
    %v700 = vor.u32 1.1754944e-38, %v699
    %v701 = vsel %vm698, %v700, %v696
    %v702 = vmul.f32 1.0, %v701
    %v703 = vmul.f32 %v682, 0.0
    %v704 = vmul.f32 %v663, %v683
    %v705 = vadd.f32 %v703, %v704
    %v706 = vtanh.pop %v705
    %v707 = vmul.f32 %v702, %v706
    %708 = vmatpush.msra.mxu0 %v557
    %709 = vmatpush.msra.mxu0 %v553
    %710 = vmatpush.msra.mxu0 %v549
    %711 = vmatpush.msra.mxu0 %v545
    %712 = vmatpush.msra.mxu0 %v541
    %713 = vmatpush.msra.mxu0 %v537
    %714 = vmatpush.msra.mxu0 %v533
    %715 = vmatpush.msra.mxu0 %v529
    %716 = vmatpush.msra.mxu0 %v525
    %717 = vmatpush.msra.mxu0 %v521
    %718 = vmatpush.msra.mxu0 %v517
    %719 = vmatpush.msra.mxu0 %v513
    %720 = vmatpush.msra.mxu0 %v509
    %721 = vmatpush.msra.mxu0 %v505
    %722 = vmatpush.msra.mxu0 %v501
    %723 = vmatpush.msra.mxu0 %v497
    %724 = vmatmul.f32.gmra.mxu0 %v707
    %v725 = vpop.f32.mrf.mxu0
    %v726 = vadd.f32 0.0, %v725
    %727 = vdwg.mxu0
    %728 = vmatpush.msra.mxu0 %v558
    %729 = vmatpush.msra.mxu0 %v554
    %730 = vmatpush.msra.mxu0 %v550
    %731 = vmatpush.msra.mxu0 %v546
    %732 = vmatpush.msra.mxu0 %v542
    %733 = vmatpush.msra.mxu0 %v538
    %734 = vmatpush.msra.mxu0 %v534
    %735 = vmatpush.msra.mxu0 %v530
    %736 = vmatpush.msra.mxu0 %v526
    %737 = vmatpush.msra.mxu0 %v522
    %738 = vmatpush.msra.mxu0 %v518
    %739 = vmatpush.msra.mxu0 %v514
    %740 = vmatpush.msra.mxu0 %v510
    %741 = vmatpush.msra.mxu0 %v506
    %742 = vmatpush.msra.mxu0 %v502
    %743 = vmatpush.msra.mxu0 %v498
    %744 = vmatmul.f32.gmra.mxu0 %v707
    %v745 = vpop.f32.mrf.mxu0
    %v746 = vadd.f32 0.0, %v745
    %747 = vdwg.mxu0
    %748 = vmatpush.msra.mxu0 %v559
    %749 = vmatpush.msra.mxu0 %v555
    %750 = vmatpush.msra.mxu0 %v551
    %751 = vmatpush.msra.mxu0 %v547
    %752 = vmatpush.msra.mxu0 %v543
    %753 = vmatpush.msra.mxu0 %v539
    %754 = vmatpush.msra.mxu0 %v535
    %755 = vmatpush.msra.mxu0 %v531
    %756 = vmatpush.msra.mxu0 %v527
    %757 = vmatpush.msra.mxu0 %v523
    %758 = vmatpush.msra.mxu0 %v519
    %759 = vmatpush.msra.mxu0 %v515
    %760 = vmatpush.msra.mxu0 %v511
    %761 = vmatpush.msra.mxu0 %v507
    %762 = vmatpush.msra.mxu0 %v503
    %763 = vmatpush.msra.mxu0 %v499
    %764 = vmatmul.f32.gmra.mxu0 %v707
    %v765 = vpop.f32.mrf.mxu0
    %v766 = vadd.f32 0.0, %v765
    %767 = vdwg.mxu0
    %768 = vmatpush.msra.mxu0 %v560
    %769 = vmatpush.msra.mxu0 %v556
    %770 = vmatpush.msra.mxu0 %v552
    %771 = vmatpush.msra.mxu0 %v548
    %772 = vmatpush.msra.mxu0 %v544
    %773 = vmatpush.msra.mxu0 %v540
    %774 = vmatpush.msra.mxu0 %v536
    %775 = vmatpush.msra.mxu0 %v532
    %776 = vmatpush.msra.mxu0 %v528
    %777 = vmatpush.msra.mxu0 %v524
    %778 = vmatpush.msra.mxu0 %v520
    %779 = vmatpush.msra.mxu0 %v516
    %780 = vmatpush.msra.mxu0 %v512
    %781 = vmatpush.msra.mxu0 %v508
    %782 = vmatpush.msra.mxu0 %v504
    %783 = vmatpush.msra.mxu0 %v500
    %784 = vmatmul.f32.gmra.mxu0 %v707
    %v785 = vpop.f32.mrf.mxu0
    %v786 = vadd.f32 0.0, %v785
    %787 = vdwg.mxu0
    %v788 = vadd.f32 %v198, %v726
    %v789 = vadd.f32 %v242, %v746
    %v790 = vadd.f32 %v286, %v766
    %v791 = vadd.f32 %v330, %v786
    %v792 = vxor.u32 %v788, 2147483648
    %v793 = vmul.f32 %v792, 1.442695
    %v794 = vpow.pop %v793
    %v795 = vadd.f32 %v794, 1.0
    %v796 = vrcp.pop %v795
    %v797 = vmul.f32 %v795, %v796
    %v798 = vsub.f32 1.0, %v797
    %v799 = vmul.f32 %v796, %v798
    %v800 = vadd.f32 %v796, %v799
    %vm801 = vweird.f32 %v795
    %vm802 = vweird.f32 %v796
    %vm803 = vmor %vm801, %vm802
    %v804 = vsel %vm803, %v796, %v800
    %v805 = vand.u32 2147483647, %v795
    %vm806 = vcmp.eq.f32.partialorder %v805, 8.507059e+37
    %v807 = vand.u32 %v795, 2147483648
    %v808 = vor.u32 1.1754944e-38, %v807
    %v809 = vsel %vm806, %v808, %v804
    %v810 = vmul.f32 1.0, %v809
    %v811 = vxor.u32 %v789, 2147483648
    %v812 = vmul.f32 %v811, 1.442695
    %v813 = vpow.pop %v812
    %v814 = vadd.f32 %v813, 1.0
    %v815 = vrcp.pop %v814
    %v816 = vmul.f32 %v814, %v815
    %v817 = vsub.f32 1.0, %v816
    %v818 = vmul.f32 %v815, %v817
    %v819 = vadd.f32 %v815, %v818
    %vm820 = vweird.f32 %v814
    %vm821 = vweird.f32 %v815
    %vm822 = vmor %vm820, %vm821
    %v823 = vsel %vm822, %v815, %v819
    %v824 = vand.u32 2147483647, %v814
    %vm825 = vcmp.eq.f32.partialorder %v824, 8.507059e+37
    %v826 = vand.u32 %v814, 2147483648
    %v827 = vor.u32 1.1754944e-38, %v826
    %v828 = vsel %vm825, %v827, %v823
    %v829 = vmul.f32 1.0, %v828
    %v830 = vtanh.pop %v790
    %v831 = vxor.u32 %v791, 2147483648
    %v832 = vmul.f32 %v831, 1.442695
    %v833 = vpow.pop %v832
    %v834 = vadd.f32 %v833, 1.0
    %v835 = vrcp.pop %v834
    %v836 = vmul.f32 %v834, %v835
    %v837 = vsub.f32 1.0, %v836
    %v838 = vmul.f32 %v835, %v837
    %v839 = vadd.f32 %v835, %v838
    %vm840 = vweird.f32 %v834
    %vm841 = vweird.f32 %v835
    %vm842 = vmor %vm840, %vm841
    %v843 = vsel %vm842, %v835, %v839
    %v844 = vand.u32 2147483647, %v834
    %vm845 = vcmp.eq.f32.partialorder %v844, 8.507059e+37
    %v846 = vand.u32 %v834, 2147483648
    %v847 = vor.u32 1.1754944e-38, %v846
    %v848 = vsel %vm845, %v847, %v843
    %v849 = vmul.f32 1.0, %v848
    %v850 = vmul.f32 %v829, %v705
    %v851 = vmul.f32 %v810, %v830
    %v852 = vadd.f32 %v850, %v851
    %v853 = vtanh.pop %v852
    %v854 = vmul.f32 %v849, %v853
    %855 = vmatpush.msra.mxu0 %v557
    %856 = vmatpush.msra.mxu0 %v553
    %857 = vmatpush.msra.mxu0 %v549
    %858 = vmatpush.msra.mxu0 %v545
    %859 = vmatpush.msra.mxu0 %v541
    %860 = vmatpush.msra.mxu0 %v537
    %861 = vmatpush.msra.mxu0 %v533
    %862 = vmatpush.msra.mxu0 %v529
    %863 = vmatpush.msra.mxu0 %v525
    %864 = vmatpush.msra.mxu0 %v521
    %865 = vmatpush.msra.mxu0 %v517
    %866 = vmatpush.msra.mxu0 %v513
    %867 = vmatpush.msra.mxu0 %v509
    %868 = vmatpush.msra.mxu0 %v505
    %869 = vmatpush.msra.mxu0 %v501
    %870 = vmatpush.msra.mxu0 %v497
    %871 = vmatmul.f32.gmra.mxu0 %v854
    %v872 = vpop.f32.mrf.mxu0
    %v873 = vadd.f32 0.0, %v872
    %874 = vdwg.mxu0
    %875 = vmatpush.msra.mxu0 %v558
    %876 = vmatpush.msra.mxu0 %v554
    %877 = vmatpush.msra.mxu0 %v550
    %878 = vmatpush.msra.mxu0 %v546
    %879 = vmatpush.msra.mxu0 %v542
    %880 = vmatpush.msra.mxu0 %v538
    %881 = vmatpush.msra.mxu0 %v534
    %882 = vmatpush.msra.mxu0 %v530
    %883 = vmatpush.msra.mxu0 %v526
    %884 = vmatpush.msra.mxu0 %v522
    %885 = vmatpush.msra.mxu0 %v518
    %886 = vmatpush.msra.mxu0 %v514
    %887 = vmatpush.msra.mxu0 %v510
    %888 = vmatpush.msra.mxu0 %v506
    %889 = vmatpush.msra.mxu0 %v502
    %890 = vmatpush.msra.mxu0 %v498
    %891 = vmatmul.f32.gmra.mxu0 %v854
    %v892 = vpop.f32.mrf.mxu0
    %v893 = vadd.f32 0.0, %v892
    %894 = vdwg.mxu0
    %895 = vmatpush.msra.mxu0 %v559
    %896 = vmatpush.msra.mxu0 %v555
    %897 = vmatpush.msra.mxu0 %v551
    %898 = vmatpush.msra.mxu0 %v547
    %899 = vmatpush.msra.mxu0 %v543
    %900 = vmatpush.msra.mxu0 %v539
    %901 = vmatpush.msra.mxu0 %v535
    %902 = vmatpush.msra.mxu0 %v531
    %903 = vmatpush.msra.mxu0 %v527
    %904 = vmatpush.msra.mxu0 %v523
    %905 = vmatpush.msra.mxu0 %v519
    %906 = vmatpush.msra.mxu0 %v515
    %907 = vmatpush.msra.mxu0 %v511
    %908 = vmatpush.msra.mxu0 %v507
    %909 = vmatpush.msra.mxu0 %v503
    %910 = vmatpush.msra.mxu0 %v499
    %911 = vmatmul.f32.gmra.mxu0 %v854
    %v912 = vpop.f32.mrf.mxu0
    %v913 = vadd.f32 0.0, %v912
    %914 = vdwg.mxu0
    %915 = vmatpush.msra.mxu0 %v560
    %916 = vmatpush.msra.mxu0 %v556
    %917 = vmatpush.msra.mxu0 %v552
    %918 = vmatpush.msra.mxu0 %v548
    %919 = vmatpush.msra.mxu0 %v544
    %920 = vmatpush.msra.mxu0 %v540
    %921 = vmatpush.msra.mxu0 %v536
    %922 = vmatpush.msra.mxu0 %v532
    %923 = vmatpush.msra.mxu0 %v528
    %924 = vmatpush.msra.mxu0 %v524
    %925 = vmatpush.msra.mxu0 %v520
    %926 = vmatpush.msra.mxu0 %v516
    %927 = vmatpush.msra.mxu0 %v512
    %928 = vmatpush.msra.mxu0 %v508
    %929 = vmatpush.msra.mxu0 %v504
    %930 = vmatpush.msra.mxu0 %v500
    %931 = vmatmul.f32.gmra.mxu0 %v854
    %v932 = vpop.f32.mrf.mxu0
    %v933 = vadd.f32 0.0, %v932
    %934 = vdwg.mxu0
    %v935 = vadd.f32 %v201, %v873
    %v936 = vadd.f32 %v245, %v893
    %v937 = vadd.f32 %v289, %v913
    %v938 = vadd.f32 %v333, %v933
    %v939 = vxor.u32 %v935, 2147483648
    %v940 = vmul.f32 %v939, 1.442695
    %v941 = vpow.pop %v940
    %v942 = vadd.f32 %v941, 1.0
    %v943 = vrcp.pop %v942
    %v944 = vmul.f32 %v942, %v943
    %v945 = vsub.f32 1.0, %v944
    %v946 = vmul.f32 %v943, %v945
    %v947 = vadd.f32 %v943, %v946
    %vm948 = vweird.f32 %v942
    %vm949 = vweird.f32 %v943
    %vm950 = vmor %vm948, %vm949
    %v951 = vsel %vm950, %v943, %v947
    %v952 = vand.u32 2147483647, %v942
    %vm953 = vcmp.eq.f32.partialorder %v952, 8.507059e+37
    %v954 = vand.u32 %v942, 2147483648
    %v955 = vor.u32 1.1754944e-38, %v954
    %v956 = vsel %vm953, %v955, %v951
    %v957 = vmul.f32 1.0, %v956
    %v958 = vxor.u32 %v936, 2147483648
    %v959 = vmul.f32 %v958, 1.442695
    %v960 = vpow.pop %v959
    %v961 = vadd.f32 %v960, 1.0
    %v962 = vrcp.pop %v961
    %v963 = vmul.f32 %v961, %v962
    %v964 = vsub.f32 1.0, %v963
    %v965 = vmul.f32 %v962, %v964
    %v966 = vadd.f32 %v962, %v965
    %vm967 = vweird.f32 %v961
    %vm968 = vweird.f32 %v962
    %vm969 = vmor %vm967, %vm968
    %v970 = vsel %vm969, %v962, %v966
    %v971 = vand.u32 2147483647, %v961
    %vm972 = vcmp.eq.f32.partialorder %v971, 8.507059e+37
    %v973 = vand.u32 %v961, 2147483648
    %v974 = vor.u32 1.1754944e-38, %v973
    %v975 = vsel %vm972, %v974, %v970
    %v976 = vmul.f32 1.0, %v975
    %v977 = vtanh.pop %v937
    %v978 = vxor.u32 %v938, 2147483648
    %v979 = vmul.f32 %v978, 1.442695
    %v980 = vpow.pop %v979
    %v981 = vadd.f32 %v980, 1.0
    %v982 = vrcp.pop %v981
    %v983 = vmul.f32 %v981, %v982
    %v984 = vsub.f32 1.0, %v983
    %v985 = vmul.f32 %v982, %v984
    %v986 = vadd.f32 %v982, %v985
    %vm987 = vweird.f32 %v981
    %vm988 = vweird.f32 %v982
    %vm989 = vmor %vm987, %vm988
    %v990 = vsel %vm989, %v982, %v986
    %v991 = vand.u32 2147483647, %v981
    %vm992 = vcmp.eq.f32.partialorder %v991, 8.507059e+37
    %v993 = vand.u32 %v981, 2147483648
    %v994 = vor.u32 1.1754944e-38, %v993
    %v995 = vsel %vm992, %v994, %v990
    %v996 = vmul.f32 1.0, %v995
    %v997 = vmul.f32 %v976, %v852
    %v998 = vmul.f32 %v957, %v977
    %v999 = vadd.f32 %v997, %v998
    %v1000 = vtanh.pop %v999
    %v1001 = vmul.f32 %v996, %v1000
    %1002 = vmatpush.msra.mxu0 %v557
    %1003 = vmatpush.msra.mxu0 %v553
    %1004 = vmatpush.msra.mxu0 %v549
    %1005 = vmatpush.msra.mxu0 %v545
    %1006 = vmatpush.msra.mxu0 %v541
    %1007 = vmatpush.msra.mxu0 %v537
    %1008 = vmatpush.msra.mxu0 %v533
    %1009 = vmatpush.msra.mxu0 %v529
    %1010 = vmatpush.msra.mxu0 %v525
    %1011 = vmatpush.msra.mxu0 %v521
    %1012 = vmatpush.msra.mxu0 %v517
    %1013 = vmatpush.msra.mxu0 %v513
    %1014 = vmatpush.msra.mxu0 %v509
    %1015 = vmatpush.msra.mxu0 %v505
    %1016 = vmatpush.msra.mxu0 %v501
    %1017 = vmatpush.msra.mxu0 %v497
    %1018 = vmatmul.f32.gmra.mxu0 %v1001
    %v1019 = vpop.f32.mrf.mxu0
    %v1020 = vadd.f32 0.0, %v1019
    %1021 = vdwg.mxu0
    %1022 = vmatpush.msra.mxu0 %v558
    %1023 = vmatpush.msra.mxu0 %v554
    %1024 = vmatpush.msra.mxu0 %v550
    %1025 = vmatpush.msra.mxu0 %v546
    %1026 = vmatpush.msra.mxu0 %v542
    %1027 = vmatpush.msra.mxu0 %v538
    %1028 = vmatpush.msra.mxu0 %v534
    %1029 = vmatpush.msra.mxu0 %v530
    %1030 = vmatpush.msra.mxu0 %v526
    %1031 = vmatpush.msra.mxu0 %v522
    %1032 = vmatpush.msra.mxu0 %v518
    %1033 = vmatpush.msra.mxu0 %v514
    %1034 = vmatpush.msra.mxu0 %v510
    %1035 = vmatpush.msra.mxu0 %v506
    %1036 = vmatpush.msra.mxu0 %v502
    %1037 = vmatpush.msra.mxu0 %v498
    %1038 = vmatmul.f32.gmra.mxu0 %v1001
    %v1039 = vpop.f32.mrf.mxu0
    %v1040 = vadd.f32 0.0, %v1039
    %1041 = vdwg.mxu0
    %1042 = vmatpush.msra.mxu0 %v559
    %1043 = vmatpush.msra.mxu0 %v555
    %1044 = vmatpush.msra.mxu0 %v551
    %1045 = vmatpush.msra.mxu0 %v547
    %1046 = vmatpush.msra.mxu0 %v543
    %1047 = vmatpush.msra.mxu0 %v539
    %1048 = vmatpush.msra.mxu0 %v535
    %1049 = vmatpush.msra.mxu0 %v531
    %1050 = vmatpush.msra.mxu0 %v527
    %1051 = vmatpush.msra.mxu0 %v523
    %1052 = vmatpush.msra.mxu0 %v519
    %1053 = vmatpush.msra.mxu0 %v515
    %1054 = vmatpush.msra.mxu0 %v511
    %1055 = vmatpush.msra.mxu0 %v507
    %1056 = vmatpush.msra.mxu0 %v503
    %1057 = vmatpush.msra.mxu0 %v499
    %1058 = vmatmul.f32.gmra.mxu0 %v1001
    %v1059 = vpop.f32.mrf.mxu0
    %v1060 = vadd.f32 0.0, %v1059
    %1061 = vdwg.mxu0
    %1062 = vmatpush.msra.mxu0 %v560
    %1063 = vmatpush.msra.mxu0 %v556
    %1064 = vmatpush.msra.mxu0 %v552
    %1065 = vmatpush.msra.mxu0 %v548
    %1066 = vmatpush.msra.mxu0 %v544
    %1067 = vmatpush.msra.mxu0 %v540
    %1068 = vmatpush.msra.mxu0 %v536
    %1069 = vmatpush.msra.mxu0 %v532
    %1070 = vmatpush.msra.mxu0 %v528
    %1071 = vmatpush.msra.mxu0 %v524
    %1072 = vmatpush.msra.mxu0 %v520
    %1073 = vmatpush.msra.mxu0 %v516
    %1074 = vmatpush.msra.mxu0 %v512
    %1075 = vmatpush.msra.mxu0 %v508
    %1076 = vmatpush.msra.mxu0 %v504
    %1077 = vmatpush.msra.mxu0 %v500
    %1078 = vmatmul.f32.gmra.mxu0 %v1001
    %v1079 = vpop.f32.mrf.mxu0
    %v1080 = vadd.f32 0.0, %v1079
    %1081 = vdwg.mxu0
    %v1082 = vadd.f32 %v204, %v1020
    %v1083 = vadd.f32 %v248, %v1040
    %v1084 = vadd.f32 %v292, %v1060
    %v1085 = vadd.f32 %v336, %v1080
    %v1086 = vxor.u32 %v1082, 2147483648
    %v1087 = vmul.f32 %v1086, 1.442695
    %v1088 = vpow.pop %v1087
    %v1089 = vadd.f32 %v1088, 1.0
    %v1090 = vrcp.pop %v1089
    %v1091 = vmul.f32 %v1089, %v1090
    %v1092 = vsub.f32 1.0, %v1091
    %v1093 = vmul.f32 %v1090, %v1092
    %v1094 = vadd.f32 %v1090, %v1093
    %vm1095 = vweird.f32 %v1089
    %vm1096 = vweird.f32 %v1090
    %vm1097 = vmor %vm1095, %vm1096
    %v1098 = vsel %vm1097, %v1090, %v1094
    %v1099 = vand.u32 2147483647, %v1089
    %vm1100 = vcmp.eq.f32.partialorder %v1099, 8.507059e+37
    %v1101 = vand.u32 %v1089, 2147483648
    %v1102 = vor.u32 1.1754944e-38, %v1101
    %v1103 = vsel %vm1100, %v1102, %v1098
    %v1104 = vmul.f32 1.0, %v1103
    %v1105 = vxor.u32 %v1083, 2147483648
    %v1106 = vmul.f32 %v1105, 1.442695
    %v1107 = vpow.pop %v1106
    %v1108 = vadd.f32 %v1107, 1.0
    %v1109 = vrcp.pop %v1108
    %v1110 = vmul.f32 %v1108, %v1109
    %v1111 = vsub.f32 1.0, %v1110
    %v1112 = vmul.f32 %v1109, %v1111
    %v1113 = vadd.f32 %v1109, %v1112
    %vm1114 = vweird.f32 %v1108
    %vm1115 = vweird.f32 %v1109
    %vm1116 = vmor %vm1114, %vm1115
    %v1117 = vsel %vm1116, %v1109, %v1113
    %v1118 = vand.u32 2147483647, %v1108
    %vm1119 = vcmp.eq.f32.partialorder %v1118, 8.507059e+37
    %v1120 = vand.u32 %v1108, 2147483648
    %v1121 = vor.u32 1.1754944e-38, %v1120
    %v1122 = vsel %vm1119, %v1121, %v1117
    %v1123 = vmul.f32 1.0, %v1122
    %v1124 = vtanh.pop %v1084
    %v1125 = vxor.u32 %v1085, 2147483648
    %v1126 = vmul.f32 %v1125, 1.442695
    %v1127 = vpow.pop %v1126
    %v1128 = vadd.f32 %v1127, 1.0
    %v1129 = vrcp.pop %v1128
    %v1130 = vmul.f32 %v1128, %v1129
    %v1131 = vsub.f32 1.0, %v1130
    %v1132 = vmul.f32 %v1129, %v1131
    %v1133 = vadd.f32 %v1129, %v1132
    %vm1134 = vweird.f32 %v1128
    %vm1135 = vweird.f32 %v1129
    %vm1136 = vmor %vm1134, %vm1135
    %v1137 = vsel %vm1136, %v1129, %v1133
    %v1138 = vand.u32 2147483647, %v1128
    %vm1139 = vcmp.eq.f32.partialorder %v1138, 8.507059e+37
    %v1140 = vand.u32 %v1128, 2147483648
    %v1141 = vor.u32 1.1754944e-38, %v1140
    %v1142 = vsel %vm1139, %v1141, %v1137
    %v1143 = vmul.f32 1.0, %v1142
    %v1144 = vmul.f32 %v1123, %v999
    %v1145 = vmul.f32 %v1104, %v1124
    %v1146 = vadd.f32 %v1144, %v1145
    %v1147 = vtanh.pop %v1146
    %v1148 = vmul.f32 %v1143, %v1147
    %1149 = vmatpush.msra.mxu0 %v557
    %1150 = vmatpush.msra.mxu0 %v553
    %1151 = vmatpush.msra.mxu0 %v549
    %1152 = vmatpush.msra.mxu0 %v545
    %1153 = vmatpush.msra.mxu0 %v541
    %1154 = vmatpush.msra.mxu0 %v537
    %1155 = vmatpush.msra.mxu0 %v533
    %1156 = vmatpush.msra.mxu0 %v529
    %1157 = vmatpush.msra.mxu0 %v525
    %1158 = vmatpush.msra.mxu0 %v521
    %1159 = vmatpush.msra.mxu0 %v517
    %1160 = vmatpush.msra.mxu0 %v513
    %1161 = vmatpush.msra.mxu0 %v509
    %1162 = vmatpush.msra.mxu0 %v505
    %1163 = vmatpush.msra.mxu0 %v501
    %1164 = vmatpush.msra.mxu0 %v497
    %1165 = vmatmul.f32.gmra.mxu0 %v1148
    %v1166 = vpop.f32.mrf.mxu0
    %v1167 = vadd.f32 0.0, %v1166
    %1168 = vdwg.mxu0
    %1169 = vmatpush.msra.mxu0 %v558
    %1170 = vmatpush.msra.mxu0 %v554
    %1171 = vmatpush.msra.mxu0 %v550
    %1172 = vmatpush.msra.mxu0 %v546
    %1173 = vmatpush.msra.mxu0 %v542
    %1174 = vmatpush.msra.mxu0 %v538
    %1175 = vmatpush.msra.mxu0 %v534
    %1176 = vmatpush.msra.mxu0 %v530
    %1177 = vmatpush.msra.mxu0 %v526
    %1178 = vmatpush.msra.mxu0 %v522
    %1179 = vmatpush.msra.mxu0 %v518
    %1180 = vmatpush.msra.mxu0 %v514
    %1181 = vmatpush.msra.mxu0 %v510
    %1182 = vmatpush.msra.mxu0 %v506
    %1183 = vmatpush.msra.mxu0 %v502
    %1184 = vmatpush.msra.mxu0 %v498
    %1185 = vmatmul.f32.gmra.mxu0 %v1148
    %v1186 = vpop.f32.mrf.mxu0
    %v1187 = vadd.f32 0.0, %v1186
    %1188 = vdwg.mxu0
    %1189 = vmatpush.msra.mxu0 %v559
    %1190 = vmatpush.msra.mxu0 %v555
    %1191 = vmatpush.msra.mxu0 %v551
    %1192 = vmatpush.msra.mxu0 %v547
    %1193 = vmatpush.msra.mxu0 %v543
    %1194 = vmatpush.msra.mxu0 %v539
    %1195 = vmatpush.msra.mxu0 %v535
    %1196 = vmatpush.msra.mxu0 %v531
    %1197 = vmatpush.msra.mxu0 %v527
    %1198 = vmatpush.msra.mxu0 %v523
    %1199 = vmatpush.msra.mxu0 %v519
    %1200 = vmatpush.msra.mxu0 %v515
    %1201 = vmatpush.msra.mxu0 %v511
    %1202 = vmatpush.msra.mxu0 %v507
    %1203 = vmatpush.msra.mxu0 %v503
    %1204 = vmatpush.msra.mxu0 %v499
    %1205 = vmatmul.f32.gmra.mxu0 %v1148
    %v1206 = vpop.f32.mrf.mxu0
    %v1207 = vadd.f32 0.0, %v1206
    %1208 = vdwg.mxu0
    %1209 = vmatpush.msra.mxu0 %v560
    %1210 = vmatpush.msra.mxu0 %v556
    %1211 = vmatpush.msra.mxu0 %v552
    %1212 = vmatpush.msra.mxu0 %v548
    %1213 = vmatpush.msra.mxu0 %v544
    %1214 = vmatpush.msra.mxu0 %v540
    %1215 = vmatpush.msra.mxu0 %v536
    %1216 = vmatpush.msra.mxu0 %v532
    %1217 = vmatpush.msra.mxu0 %v528
    %1218 = vmatpush.msra.mxu0 %v524
    %1219 = vmatpush.msra.mxu0 %v520
    %1220 = vmatpush.msra.mxu0 %v516
    %1221 = vmatpush.msra.mxu0 %v512
    %1222 = vmatpush.msra.mxu0 %v508
    %1223 = vmatpush.msra.mxu0 %v504
    %1224 = vmatpush.msra.mxu0 %v500
    %1225 = vmatmul.f32.gmra.mxu0 %v1148
    %v1226 = vpop.f32.mrf.mxu0
    %v1227 = vadd.f32 0.0, %v1226
    %1228 = vdwg.mxu0
    %v1229 = vadd.f32 %v207, %v1167
    %v1230 = vadd.f32 %v251, %v1187
    %v1231 = vadd.f32 %v295, %v1207
    %v1232 = vadd.f32 %v339, %v1227
    %v1233 = vxor.u32 %v1229, 2147483648
    %v1234 = vmul.f32 %v1233, 1.442695
    %v1235 = vpow.pop %v1234
    %v1236 = vadd.f32 %v1235, 1.0
    %v1237 = vrcp.pop %v1236
    %v1238 = vmul.f32 %v1236, %v1237
    %v1239 = vsub.f32 1.0, %v1238
    %v1240 = vmul.f32 %v1237, %v1239
    %v1241 = vadd.f32 %v1237, %v1240
    %vm1242 = vweird.f32 %v1236
    %vm1243 = vweird.f32 %v1237
    %vm1244 = vmor %vm1242, %vm1243
    %v1245 = vsel %vm1244, %v1237, %v1241
    %v1246 = vand.u32 2147483647, %v1236
    %vm1247 = vcmp.eq.f32.partialorder %v1246, 8.507059e+37
    %v1248 = vand.u32 %v1236, 2147483648
    %v1249 = vor.u32 1.1754944e-38, %v1248
    %v1250 = vsel %vm1247, %v1249, %v1245
    %v1251 = vmul.f32 1.0, %v1250
    %v1252 = vxor.u32 %v1230, 2147483648
    %v1253 = vmul.f32 %v1252, 1.442695
    %v1254 = vpow.pop %v1253
    %v1255 = vadd.f32 %v1254, 1.0
    %v1256 = vrcp.pop %v1255
    %v1257 = vmul.f32 %v1255, %v1256
    %v1258 = vsub.f32 1.0, %v1257
    %v1259 = vmul.f32 %v1256, %v1258
    %v1260 = vadd.f32 %v1256, %v1259
    %vm1261 = vweird.f32 %v1255
    %vm1262 = vweird.f32 %v1256
    %vm1263 = vmor %vm1261, %vm1262
    %v1264 = vsel %vm1263, %v1256, %v1260
    %v1265 = vand.u32 2147483647, %v1255
    %vm1266 = vcmp.eq.f32.partialorder %v1265, 8.507059e+37
    %v1267 = vand.u32 %v1255, 2147483648
    %v1268 = vor.u32 1.1754944e-38, %v1267
    %v1269 = vsel %vm1266, %v1268, %v1264
    %v1270 = vmul.f32 1.0, %v1269
    %v1271 = vtanh.pop %v1231
    %v1272 = vxor.u32 %v1232, 2147483648
    %v1273 = vmul.f32 %v1272, 1.442695
    %v1274 = vpow.pop %v1273
    %v1275 = vadd.f32 %v1274, 1.0
    %v1276 = vrcp.pop %v1275
    %v1277 = vmul.f32 %v1275, %v1276
    %v1278 = vsub.f32 1.0, %v1277
    %v1279 = vmul.f32 %v1276, %v1278
    %v1280 = vadd.f32 %v1276, %v1279
    %vm1281 = vweird.f32 %v1275
    %vm1282 = vweird.f32 %v1276
    %vm1283 = vmor %vm1281, %vm1282
    %v1284 = vsel %vm1283, %v1276, %v1280
    %v1285 = vand.u32 2147483647, %v1275
    %vm1286 = vcmp.eq.f32.partialorder %v1285, 8.507059e+37
    %v1287 = vand.u32 %v1275, 2147483648
    %v1288 = vor.u32 1.1754944e-38, %v1287
    %v1289 = vsel %vm1286, %v1288, %v1284
    %v1290 = vmul.f32 1.0, %v1289
    %v1291 = vmul.f32 %v1270, %v1146
    %v1292 = vmul.f32 %v1251, %v1271
    %v1293 = vadd.f32 %v1291, %v1292
    %v1294 = vtanh.pop %v1293
    %v1295 = vmul.f32 %v1290, %v1294
    %1296 = vmatpush.msra.mxu0 %v557
    %1297 = vmatpush.msra.mxu0 %v553
    %1298 = vmatpush.msra.mxu0 %v549
    %1299 = vmatpush.msra.mxu0 %v545
    %1300 = vmatpush.msra.mxu0 %v541
    %1301 = vmatpush.msra.mxu0 %v537
    %1302 = vmatpush.msra.mxu0 %v533
    %1303 = vmatpush.msra.mxu0 %v529
    %1304 = vmatpush.msra.mxu0 %v525
    %1305 = vmatpush.msra.mxu0 %v521
    %1306 = vmatpush.msra.mxu0 %v517
    %1307 = vmatpush.msra.mxu0 %v513
    %1308 = vmatpush.msra.mxu0 %v509
    %1309 = vmatpush.msra.mxu0 %v505
    %1310 = vmatpush.msra.mxu0 %v501
    %1311 = vmatpush.msra.mxu0 %v497
    %1312 = vmatmul.f32.gmra.mxu0 %v1295
    %v1313 = vpop.f32.mrf.mxu0
    %v1314 = vadd.f32 0.0, %v1313
    %1315 = vdwg.mxu0
    %1316 = vmatpush.msra.mxu0 %v558
    %1317 = vmatpush.msra.mxu0 %v554
    %1318 = vmatpush.msra.mxu0 %v550
    %1319 = vmatpush.msra.mxu0 %v546
    %1320 = vmatpush.msra.mxu0 %v542
    %1321 = vmatpush.msra.mxu0 %v538
    %1322 = vmatpush.msra.mxu0 %v534
    %1323 = vmatpush.msra.mxu0 %v530
    %1324 = vmatpush.msra.mxu0 %v526
    %1325 = vmatpush.msra.mxu0 %v522
    %1326 = vmatpush.msra.mxu0 %v518
    %1327 = vmatpush.msra.mxu0 %v514
    %1328 = vmatpush.msra.mxu0 %v510
    %1329 = vmatpush.msra.mxu0 %v506
    %1330 = vmatpush.msra.mxu0 %v502
    %1331 = vmatpush.msra.mxu0 %v498
    %1332 = vmatmul.f32.gmra.mxu0 %v1295
    %v1333 = vpop.f32.mrf.mxu0
    %v1334 = vadd.f32 0.0, %v1333
    %1335 = vdwg.mxu0
    %1336 = vmatpush.msra.mxu0 %v559
    %1337 = vmatpush.msra.mxu0 %v555
    %1338 = vmatpush.msra.mxu0 %v551
    %1339 = vmatpush.msra.mxu0 %v547
    %1340 = vmatpush.msra.mxu0 %v543
    %1341 = vmatpush.msra.mxu0 %v539
    %1342 = vmatpush.msra.mxu0 %v535
    %1343 = vmatpush.msra.mxu0 %v531
    %1344 = vmatpush.msra.mxu0 %v527
    %1345 = vmatpush.msra.mxu0 %v523
    %1346 = vmatpush.msra.mxu0 %v519
    %1347 = vmatpush.msra.mxu0 %v515
    %1348 = vmatpush.msra.mxu0 %v511
    %1349 = vmatpush.msra.mxu0 %v507
    %1350 = vmatpush.msra.mxu0 %v503
    %1351 = vmatpush.msra.mxu0 %v499
    %1352 = vmatmul.f32.gmra.mxu0 %v1295
    %v1353 = vpop.f32.mrf.mxu0
    %v1354 = vadd.f32 0.0, %v1353
    %1355 = vdwg.mxu0
    %1356 = vmatpush.msra.mxu0 %v560
    %1357 = vmatpush.msra.mxu0 %v556
    %1358 = vmatpush.msra.mxu0 %v552
    %1359 = vmatpush.msra.mxu0 %v548
    %1360 = vmatpush.msra.mxu0 %v544
    %1361 = vmatpush.msra.mxu0 %v540
    %1362 = vmatpush.msra.mxu0 %v536
    %1363 = vmatpush.msra.mxu0 %v532
    %1364 = vmatpush.msra.mxu0 %v528
    %1365 = vmatpush.msra.mxu0 %v524
    %1366 = vmatpush.msra.mxu0 %v520
    %1367 = vmatpush.msra.mxu0 %v516
    %1368 = vmatpush.msra.mxu0 %v512
    %1369 = vmatpush.msra.mxu0 %v508
    %1370 = vmatpush.msra.mxu0 %v504
    %1371 = vmatpush.msra.mxu0 %v500
    %1372 = vmatmul.f32.gmra.mxu0 %v1295
    %v1373 = vpop.f32.mrf.mxu0
    %v1374 = vadd.f32 0.0, %v1373
    %1375 = vdwg.mxu0
    %v1376 = vadd.f32 %v210, %v1314
    %v1377 = vadd.f32 %v254, %v1334
    %v1378 = vadd.f32 %v298, %v1354
    %v1379 = vadd.f32 %v342, %v1374
    %v1380 = vxor.u32 %v1376, 2147483648
    %v1381 = vmul.f32 %v1380, 1.442695
    %v1382 = vpow.pop %v1381
    %v1383 = vadd.f32 %v1382, 1.0
    %v1384 = vrcp.pop %v1383
    %v1385 = vmul.f32 %v1383, %v1384
    %v1386 = vsub.f32 1.0, %v1385
    %v1387 = vmul.f32 %v1384, %v1386
    %v1388 = vadd.f32 %v1384, %v1387
    %vm1389 = vweird.f32 %v1383
    %vm1390 = vweird.f32 %v1384
    %vm1391 = vmor %vm1389, %vm1390
    %v1392 = vsel %vm1391, %v1384, %v1388
    %v1393 = vand.u32 2147483647, %v1383
    %vm1394 = vcmp.eq.f32.partialorder %v1393, 8.507059e+37
    %v1395 = vand.u32 %v1383, 2147483648
    %v1396 = vor.u32 1.1754944e-38, %v1395
    %v1397 = vsel %vm1394, %v1396, %v1392
    %v1398 = vmul.f32 1.0, %v1397
    %v1399 = vxor.u32 %v1377, 2147483648
    %v1400 = vmul.f32 %v1399, 1.442695
    %v1401 = vpow.pop %v1400
    %v1402 = vadd.f32 %v1401, 1.0
    %v1403 = vrcp.pop %v1402
    %v1404 = vmul.f32 %v1402, %v1403
    %v1405 = vsub.f32 1.0, %v1404
    %v1406 = vmul.f32 %v1403, %v1405
    %v1407 = vadd.f32 %v1403, %v1406
    %vm1408 = vweird.f32 %v1402
    %vm1409 = vweird.f32 %v1403
    %vm1410 = vmor %vm1408, %vm1409
    %v1411 = vsel %vm1410, %v1403, %v1407
    %v1412 = vand.u32 2147483647, %v1402
    %vm1413 = vcmp.eq.f32.partialorder %v1412, 8.507059e+37
    %v1414 = vand.u32 %v1402, 2147483648
    %v1415 = vor.u32 1.1754944e-38, %v1414
    %v1416 = vsel %vm1413, %v1415, %v1411
    %v1417 = vmul.f32 1.0, %v1416
    %v1418 = vtanh.pop %v1378
    %v1419 = vxor.u32 %v1379, 2147483648
    %v1420 = vmul.f32 %v1419, 1.442695
    %v1421 = vpow.pop %v1420
    %v1422 = vadd.f32 %v1421, 1.0
    %v1423 = vrcp.pop %v1422
    %v1424 = vmul.f32 %v1422, %v1423
    %v1425 = vsub.f32 1.0, %v1424
    %v1426 = vmul.f32 %v1423, %v1425
    %v1427 = vadd.f32 %v1423, %v1426
    %vm1428 = vweird.f32 %v1422
    %vm1429 = vweird.f32 %v1423
    %vm1430 = vmor %vm1428, %vm1429
    %v1431 = vsel %vm1430, %v1423, %v1427
    %v1432 = vand.u32 2147483647, %v1422
    %vm1433 = vcmp.eq.f32.partialorder %v1432, 8.507059e+37
    %v1434 = vand.u32 %v1422, 2147483648
    %v1435 = vor.u32 1.1754944e-38, %v1434
    %v1436 = vsel %vm1433, %v1435, %v1431
    %v1437 = vmul.f32 1.0, %v1436
    %v1438 = vmul.f32 %v1417, %v1293
    %v1439 = vmul.f32 %v1398, %v1418
    %v1440 = vadd.f32 %v1438, %v1439
    %v1441 = vtanh.pop %v1440
    %v1442 = vmul.f32 %v1437, %v1441
    %1443 = vmatpush.msra.mxu0 %v557
    %1444 = vmatpush.msra.mxu0 %v553
    %1445 = vmatpush.msra.mxu0 %v549
    %1446 = vmatpush.msra.mxu0 %v545
    %1447 = vmatpush.msra.mxu0 %v541
    %1448 = vmatpush.msra.mxu0 %v537
    %1449 = vmatpush.msra.mxu0 %v533
    %1450 = vmatpush.msra.mxu0 %v529
    %1451 = vmatpush.msra.mxu0 %v525
    %1452 = vmatpush.msra.mxu0 %v521
    %1453 = vmatpush.msra.mxu0 %v517
    %1454 = vmatpush.msra.mxu0 %v513
    %1455 = vmatpush.msra.mxu0 %v509
    %1456 = vmatpush.msra.mxu0 %v505
    %1457 = vmatpush.msra.mxu0 %v501
    %1458 = vmatpush.msra.mxu0 %v497
    %1459 = vmatmul.f32.gmra.mxu0 %v1442
    %v1460 = vpop.f32.mrf.mxu0
    %v1461 = vadd.f32 0.0, %v1460
    %1462 = vdwg.mxu0
    %1463 = vmatpush.msra.mxu0 %v558
    %1464 = vmatpush.msra.mxu0 %v554
    %1465 = vmatpush.msra.mxu0 %v550
    %1466 = vmatpush.msra.mxu0 %v546
    %1467 = vmatpush.msra.mxu0 %v542
    %1468 = vmatpush.msra.mxu0 %v538
    %1469 = vmatpush.msra.mxu0 %v534
    %1470 = vmatpush.msra.mxu0 %v530
    %1471 = vmatpush.msra.mxu0 %v526
    %1472 = vmatpush.msra.mxu0 %v522
    %1473 = vmatpush.msra.mxu0 %v518
    %1474 = vmatpush.msra.mxu0 %v514
    %1475 = vmatpush.msra.mxu0 %v510
    %1476 = vmatpush.msra.mxu0 %v506
    %1477 = vmatpush.msra.mxu0 %v502
    %1478 = vmatpush.msra.mxu0 %v498
    %1479 = vmatmul.f32.gmra.mxu0 %v1442
    %v1480 = vpop.f32.mrf.mxu0
    %v1481 = vadd.f32 0.0, %v1480
    %1482 = vdwg.mxu0
    %1483 = vmatpush.msra.mxu0 %v559
    %1484 = vmatpush.msra.mxu0 %v555
    %1485 = vmatpush.msra.mxu0 %v551
    %1486 = vmatpush.msra.mxu0 %v547
    %1487 = vmatpush.msra.mxu0 %v543
    %1488 = vmatpush.msra.mxu0 %v539
    %1489 = vmatpush.msra.mxu0 %v535
    %1490 = vmatpush.msra.mxu0 %v531
    %1491 = vmatpush.msra.mxu0 %v527
    %1492 = vmatpush.msra.mxu0 %v523
    %1493 = vmatpush.msra.mxu0 %v519
    %1494 = vmatpush.msra.mxu0 %v515
    %1495 = vmatpush.msra.mxu0 %v511
    %1496 = vmatpush.msra.mxu0 %v507
    %1497 = vmatpush.msra.mxu0 %v503
    %1498 = vmatpush.msra.mxu0 %v499
    %1499 = vmatmul.f32.gmra.mxu0 %v1442
    %v1500 = vpop.f32.mrf.mxu0
    %v1501 = vadd.f32 0.0, %v1500
    %1502 = vdwg.mxu0
    %1503 = vmatpush.msra.mxu0 %v560
    %1504 = vmatpush.msra.mxu0 %v556
    %1505 = vmatpush.msra.mxu0 %v552
    %1506 = vmatpush.msra.mxu0 %v548
    %1507 = vmatpush.msra.mxu0 %v544
    %1508 = vmatpush.msra.mxu0 %v540
    %1509 = vmatpush.msra.mxu0 %v536
    %1510 = vmatpush.msra.mxu0 %v532
    %1511 = vmatpush.msra.mxu0 %v528
    %1512 = vmatpush.msra.mxu0 %v524
    %1513 = vmatpush.msra.mxu0 %v520
    %1514 = vmatpush.msra.mxu0 %v516
    %1515 = vmatpush.msra.mxu0 %v512
    %1516 = vmatpush.msra.mxu0 %v508
    %1517 = vmatpush.msra.mxu0 %v504
    %1518 = vmatpush.msra.mxu0 %v500
    %1519 = vmatmul.f32.gmra.mxu0 %v1442
    %v1520 = vpop.f32.mrf.mxu0
    %v1521 = vadd.f32 0.0, %v1520
    %1522 = vdwg.mxu0
    %v1523 = vadd.f32 %v213, %v1461
    %v1524 = vadd.f32 %v257, %v1481
    %v1525 = vadd.f32 %v301, %v1501
    %v1526 = vadd.f32 %v345, %v1521
    %v1527 = vxor.u32 %v1523, 2147483648
    %v1528 = vmul.f32 %v1527, 1.442695
    %v1529 = vpow.pop %v1528
    %v1530 = vadd.f32 %v1529, 1.0
    %v1531 = vrcp.pop %v1530
    %v1532 = vmul.f32 %v1530, %v1531
    %v1533 = vsub.f32 1.0, %v1532
    %v1534 = vmul.f32 %v1531, %v1533
    %v1535 = vadd.f32 %v1531, %v1534
    %vm1536 = vweird.f32 %v1530
    %vm1537 = vweird.f32 %v1531
    %vm1538 = vmor %vm1536, %vm1537
    %v1539 = vsel %vm1538, %v1531, %v1535
    %v1540 = vand.u32 2147483647, %v1530
    %vm1541 = vcmp.eq.f32.partialorder %v1540, 8.507059e+37
    %v1542 = vand.u32 %v1530, 2147483648
    %v1543 = vor.u32 1.1754944e-38, %v1542
    %v1544 = vsel %vm1541, %v1543, %v1539
    %v1545 = vmul.f32 1.0, %v1544
    %v1546 = vxor.u32 %v1524, 2147483648
    %v1547 = vmul.f32 %v1546, 1.442695
    %v1548 = vpow.pop %v1547
    %v1549 = vadd.f32 %v1548, 1.0
    %v1550 = vrcp.pop %v1549
    %v1551 = vmul.f32 %v1549, %v1550
    %v1552 = vsub.f32 1.0, %v1551
    %v1553 = vmul.f32 %v1550, %v1552
    %v1554 = vadd.f32 %v1550, %v1553
    %vm1555 = vweird.f32 %v1549
    %vm1556 = vweird.f32 %v1550
    %vm1557 = vmor %vm1555, %vm1556
    %v1558 = vsel %vm1557, %v1550, %v1554
    %v1559 = vand.u32 2147483647, %v1549
    %vm1560 = vcmp.eq.f32.partialorder %v1559, 8.507059e+37
    %v1561 = vand.u32 %v1549, 2147483648
    %v1562 = vor.u32 1.1754944e-38, %v1561
    %v1563 = vsel %vm1560, %v1562, %v1558
    %v1564 = vmul.f32 1.0, %v1563
    %v1565 = vtanh.pop %v1525
    %v1566 = vxor.u32 %v1526, 2147483648
    %v1567 = vmul.f32 %v1566, 1.442695
    %v1568 = vpow.pop %v1567
    %v1569 = vadd.f32 %v1568, 1.0
    %v1570 = vrcp.pop %v1569
    %v1571 = vmul.f32 %v1569, %v1570
    %v1572 = vsub.f32 1.0, %v1571
    %v1573 = vmul.f32 %v1570, %v1572
    %v1574 = vadd.f32 %v1570, %v1573
    %vm1575 = vweird.f32 %v1569
    %vm1576 = vweird.f32 %v1570
    %vm1577 = vmor %vm1575, %vm1576
    %v1578 = vsel %vm1577, %v1570, %v1574
    %v1579 = vand.u32 2147483647, %v1569
    %vm1580 = vcmp.eq.f32.partialorder %v1579, 8.507059e+37
    %v1581 = vand.u32 %v1569, 2147483648
    %v1582 = vor.u32 1.1754944e-38, %v1581
    %v1583 = vsel %vm1580, %v1582, %v1578
    %v1584 = vmul.f32 1.0, %v1583
    %v1585 = vmul.f32 %v1564, %v1440
    %v1586 = vmul.f32 %v1545, %v1565
    %v1587 = vadd.f32 %v1585, %v1586
    %v1588 = vtanh.pop %v1587
    %v1589 = vmul.f32 %v1584, %v1588
    %1590 = vmatpush.msra.mxu0 %v557
    %1591 = vmatpush.msra.mxu0 %v553
    %1592 = vmatpush.msra.mxu0 %v549
    %1593 = vmatpush.msra.mxu0 %v545
    %1594 = vmatpush.msra.mxu0 %v541
    %1595 = vmatpush.msra.mxu0 %v537
    %1596 = vmatpush.msra.mxu0 %v533
    %1597 = vmatpush.msra.mxu0 %v529
    %1598 = vmatpush.msra.mxu0 %v525
    %1599 = vmatpush.msra.mxu0 %v521
    %1600 = vmatpush.msra.mxu0 %v517
    %1601 = vmatpush.msra.mxu0 %v513
    %1602 = vmatpush.msra.mxu0 %v509
    %1603 = vmatpush.msra.mxu0 %v505
    %1604 = vmatpush.msra.mxu0 %v501
    %1605 = vmatpush.msra.mxu0 %v497
    %1606 = vmatmul.f32.gmra.mxu0 %v1589
    %v1607 = vpop.f32.mrf.mxu0
    %v1608 = vadd.f32 0.0, %v1607
    %1609 = vdwg.mxu0
    %1610 = vmatpush.msra.mxu0 %v558
    %1611 = vmatpush.msra.mxu0 %v554
    %1612 = vmatpush.msra.mxu0 %v550
    %1613 = vmatpush.msra.mxu0 %v546
    %1614 = vmatpush.msra.mxu0 %v542
    %1615 = vmatpush.msra.mxu0 %v538
    %1616 = vmatpush.msra.mxu0 %v534
    %1617 = vmatpush.msra.mxu0 %v530
    %1618 = vmatpush.msra.mxu0 %v526
    %1619 = vmatpush.msra.mxu0 %v522
    %1620 = vmatpush.msra.mxu0 %v518
    %1621 = vmatpush.msra.mxu0 %v514
    %1622 = vmatpush.msra.mxu0 %v510
    %1623 = vmatpush.msra.mxu0 %v506
    %1624 = vmatpush.msra.mxu0 %v502
    %1625 = vmatpush.msra.mxu0 %v498
    %1626 = vmatmul.f32.gmra.mxu0 %v1589
    %v1627 = vpop.f32.mrf.mxu0
    %v1628 = vadd.f32 0.0, %v1627
    %1629 = vdwg.mxu0
    %1630 = vmatpush.msra.mxu0 %v559
    %1631 = vmatpush.msra.mxu0 %v555
    %1632 = vmatpush.msra.mxu0 %v551
    %1633 = vmatpush.msra.mxu0 %v547
    %1634 = vmatpush.msra.mxu0 %v543
    %1635 = vmatpush.msra.mxu0 %v539
    %1636 = vmatpush.msra.mxu0 %v535
    %1637 = vmatpush.msra.mxu0 %v531
    %1638 = vmatpush.msra.mxu0 %v527
    %1639 = vmatpush.msra.mxu0 %v523
    %1640 = vmatpush.msra.mxu0 %v519
    %1641 = vmatpush.msra.mxu0 %v515
    %1642 = vmatpush.msra.mxu0 %v511
    %1643 = vmatpush.msra.mxu0 %v507
    %1644 = vmatpush.msra.mxu0 %v503
    %1645 = vmatpush.msra.mxu0 %v499
    %1646 = vmatmul.f32.gmra.mxu0 %v1589
    %v1647 = vpop.f32.mrf.mxu0
    %v1648 = vadd.f32 0.0, %v1647
    %1649 = vdwg.mxu0
    %1650 = vmatpush.msra.mxu0 %v560
    %1651 = vmatpush.msra.mxu0 %v556
    %1652 = vmatpush.msra.mxu0 %v552
    %1653 = vmatpush.msra.mxu0 %v548
    %1654 = vmatpush.msra.mxu0 %v544
    %1655 = vmatpush.msra.mxu0 %v540
    %1656 = vmatpush.msra.mxu0 %v536
    %1657 = vmatpush.msra.mxu0 %v532
    %1658 = vmatpush.msra.mxu0 %v528
    %1659 = vmatpush.msra.mxu0 %v524
    %1660 = vmatpush.msra.mxu0 %v520
    %1661 = vmatpush.msra.mxu0 %v516
    %1662 = vmatpush.msra.mxu0 %v512
    %1663 = vmatpush.msra.mxu0 %v508
    %1664 = vmatpush.msra.mxu0 %v504
    %1665 = vmatpush.msra.mxu0 %v500
    %1666 = vmatmul.f32.gmra.mxu0 %v1589
    %v1667 = vpop.f32.mrf.mxu0
    %v1668 = vadd.f32 0.0, %v1667
    %1669 = vdwg.mxu0
    %v1670 = vadd.f32 %v216, %v1608
    %v1671 = vadd.f32 %v260, %v1628
    %v1672 = vadd.f32 %v304, %v1648
    %v1673 = vadd.f32 %v348, %v1668
    %v1674 = vxor.u32 %v1670, 2147483648
    %v1675 = vmul.f32 %v1674, 1.442695
    %v1676 = vpow.pop %v1675
    %v1677 = vadd.f32 %v1676, 1.0
    %v1678 = vrcp.pop %v1677
    %v1679 = vmul.f32 %v1677, %v1678
    %v1680 = vsub.f32 1.0, %v1679
    %v1681 = vmul.f32 %v1678, %v1680
    %v1682 = vadd.f32 %v1678, %v1681
    %vm1683 = vweird.f32 %v1677
    %vm1684 = vweird.f32 %v1678
    %vm1685 = vmor %vm1683, %vm1684
    %v1686 = vsel %vm1685, %v1678, %v1682
    %v1687 = vand.u32 2147483647, %v1677
    %vm1688 = vcmp.eq.f32.partialorder %v1687, 8.507059e+37
    %v1689 = vand.u32 %v1677, 2147483648
    %v1690 = vor.u32 1.1754944e-38, %v1689
    %v1691 = vsel %vm1688, %v1690, %v1686
    %v1692 = vmul.f32 1.0, %v1691
    %v1693 = vxor.u32 %v1671, 2147483648
    %v1694 = vmul.f32 %v1693, 1.442695
    %v1695 = vpow.pop %v1694
    %v1696 = vadd.f32 %v1695, 1.0
    %v1697 = vrcp.pop %v1696
    %v1698 = vmul.f32 %v1696, %v1697
    %v1699 = vsub.f32 1.0, %v1698
    %v1700 = vmul.f32 %v1697, %v1699
    %v1701 = vadd.f32 %v1697, %v1700
    %vm1702 = vweird.f32 %v1696
    %vm1703 = vweird.f32 %v1697
    %vm1704 = vmor %vm1702, %vm1703
    %v1705 = vsel %vm1704, %v1697, %v1701
    %v1706 = vand.u32 2147483647, %v1696
    %vm1707 = vcmp.eq.f32.partialorder %v1706, 8.507059e+37
    %v1708 = vand.u32 %v1696, 2147483648
    %v1709 = vor.u32 1.1754944e-38, %v1708
    %v1710 = vsel %vm1707, %v1709, %v1705
    %v1711 = vmul.f32 1.0, %v1710
    %v1712 = vtanh.pop %v1672
    %v1713 = vxor.u32 %v1673, 2147483648
    %v1714 = vmul.f32 %v1713, 1.442695
    %v1715 = vpow.pop %v1714
    %v1716 = vadd.f32 %v1715, 1.0
    %v1717 = vrcp.pop %v1716
    %v1718 = vmul.f32 %v1716, %v1717
    %v1719 = vsub.f32 1.0, %v1718
    %v1720 = vmul.f32 %v1717, %v1719
    %v1721 = vadd.f32 %v1717, %v1720
    %vm1722 = vweird.f32 %v1716
    %vm1723 = vweird.f32 %v1717
    %vm1724 = vmor %vm1722, %vm1723
    %v1725 = vsel %vm1724, %v1717, %v1721
    %v1726 = vand.u32 2147483647, %v1716
    %vm1727 = vcmp.eq.f32.partialorder %v1726, 8.507059e+37
    %v1728 = vand.u32 %v1716, 2147483648
    %v1729 = vor.u32 1.1754944e-38, %v1728
    %v1730 = vsel %vm1727, %v1729, %v1725
    %v1731 = vmul.f32 1.0, %v1730
    %v1732 = vmul.f32 %v1711, %v1587
    %v1733 = vmul.f32 %v1692, %v1712
    %v1734 = vadd.f32 %v1732, %v1733
    %v1735 = vtanh.pop %v1734
    %v1736 = vmul.f32 %v1731, %v1735
    %1737 = vmatpush.msra.mxu0 %v557
    %1738 = vmatpush.msra.mxu0 %v553
    %1739 = vmatpush.msra.mxu0 %v549
    %1740 = vmatpush.msra.mxu0 %v545
    %1741 = vmatpush.msra.mxu0 %v541
    %1742 = vmatpush.msra.mxu0 %v537
    %1743 = vmatpush.msra.mxu0 %v533
    %1744 = vmatpush.msra.mxu0 %v529
    %1745 = vmatpush.msra.mxu0 %v525
    %1746 = vmatpush.msra.mxu0 %v521
    %1747 = vmatpush.msra.mxu0 %v517
    %1748 = vmatpush.msra.mxu0 %v513
    %1749 = vmatpush.msra.mxu0 %v509
    %1750 = vmatpush.msra.mxu0 %v505
    %1751 = vmatpush.msra.mxu0 %v501
    %1752 = vmatpush.msra.mxu0 %v497
    %1753 = vmatmul.f32.gmra.mxu0 %v1736
    %v1754 = vpop.f32.mrf.mxu0
    %v1755 = vadd.f32 0.0, %v1754
    %1756 = vdwg.mxu0
    %1757 = vmatpush.msra.mxu0 %v558
    %1758 = vmatpush.msra.mxu0 %v554
    %1759 = vmatpush.msra.mxu0 %v550
    %1760 = vmatpush.msra.mxu0 %v546
    %1761 = vmatpush.msra.mxu0 %v542
    %1762 = vmatpush.msra.mxu0 %v538
    %1763 = vmatpush.msra.mxu0 %v534
    %1764 = vmatpush.msra.mxu0 %v530
    %1765 = vmatpush.msra.mxu0 %v526
    %1766 = vmatpush.msra.mxu0 %v522
    %1767 = vmatpush.msra.mxu0 %v518
    %1768 = vmatpush.msra.mxu0 %v514
    %1769 = vmatpush.msra.mxu0 %v510
    %1770 = vmatpush.msra.mxu0 %v506
    %1771 = vmatpush.msra.mxu0 %v502
    %1772 = vmatpush.msra.mxu0 %v498
    %1773 = vmatmul.f32.gmra.mxu0 %v1736
    %v1774 = vpop.f32.mrf.mxu0
    %v1775 = vadd.f32 0.0, %v1774
    %1776 = vdwg.mxu0
    %1777 = vmatpush.msra.mxu0 %v559
    %1778 = vmatpush.msra.mxu0 %v555
    %1779 = vmatpush.msra.mxu0 %v551
    %1780 = vmatpush.msra.mxu0 %v547
    %1781 = vmatpush.msra.mxu0 %v543
    %1782 = vmatpush.msra.mxu0 %v539
    %1783 = vmatpush.msra.mxu0 %v535
    %1784 = vmatpush.msra.mxu0 %v531
    %1785 = vmatpush.msra.mxu0 %v527
    %1786 = vmatpush.msra.mxu0 %v523
    %1787 = vmatpush.msra.mxu0 %v519
    %1788 = vmatpush.msra.mxu0 %v515
    %1789 = vmatpush.msra.mxu0 %v511
    %1790 = vmatpush.msra.mxu0 %v507
    %1791 = vmatpush.msra.mxu0 %v503
    %1792 = vmatpush.msra.mxu0 %v499
    %1793 = vmatmul.f32.gmra.mxu0 %v1736
    %v1794 = vpop.f32.mrf.mxu0
    %v1795 = vadd.f32 0.0, %v1794
    %1796 = vdwg.mxu0
    %1797 = vmatpush.msra.mxu0 %v560
    %1798 = vmatpush.msra.mxu0 %v556
    %1799 = vmatpush.msra.mxu0 %v552
    %1800 = vmatpush.msra.mxu0 %v548
    %1801 = vmatpush.msra.mxu0 %v544
    %1802 = vmatpush.msra.mxu0 %v540
    %1803 = vmatpush.msra.mxu0 %v536
    %1804 = vmatpush.msra.mxu0 %v532
    %1805 = vmatpush.msra.mxu0 %v528
    %1806 = vmatpush.msra.mxu0 %v524
    %1807 = vmatpush.msra.mxu0 %v520
    %1808 = vmatpush.msra.mxu0 %v516
    %1809 = vmatpush.msra.mxu0 %v512
    %1810 = vmatpush.msra.mxu0 %v508
    %1811 = vmatpush.msra.mxu0 %v504
    %1812 = vmatpush.msra.mxu0 %v500
    %1813 = vmatmul.f32.gmra.mxu0 %v1736
    %v1814 = vpop.f32.mrf.mxu0
    %v1815 = vadd.f32 0.0, %v1814
    %1816 = vdwg.mxu0
    %v1817 = vadd.f32 %v219, %v1755
    %v1818 = vadd.f32 %v263, %v1775
    %v1819 = vadd.f32 %v307, %v1795
    %v1820 = vadd.f32 %v351, %v1815
    %v1821 = vxor.u32 %v1817, 2147483648
    %v1822 = vmul.f32 %v1821, 1.442695
    %v1823 = vpow.pop %v1822
    %v1824 = vadd.f32 %v1823, 1.0
    %v1825 = vrcp.pop %v1824
    %v1826 = vmul.f32 %v1824, %v1825
    %v1827 = vsub.f32 1.0, %v1826
    %v1828 = vmul.f32 %v1825, %v1827
    %v1829 = vadd.f32 %v1825, %v1828
    %vm1830 = vweird.f32 %v1824
    %vm1831 = vweird.f32 %v1825
    %vm1832 = vmor %vm1830, %vm1831
    %v1833 = vsel %vm1832, %v1825, %v1829
    %v1834 = vand.u32 2147483647, %v1824
    %vm1835 = vcmp.eq.f32.partialorder %v1834, 8.507059e+37
    %v1836 = vand.u32 %v1824, 2147483648
    %v1837 = vor.u32 1.1754944e-38, %v1836
    %v1838 = vsel %vm1835, %v1837, %v1833
    %v1839 = vmul.f32 1.0, %v1838
    %v1840 = vxor.u32 %v1818, 2147483648
    %v1841 = vmul.f32 %v1840, 1.442695
    %v1842 = vpow.pop %v1841
    %v1843 = vadd.f32 %v1842, 1.0
    %v1844 = vrcp.pop %v1843
    %v1845 = vmul.f32 %v1843, %v1844
    %v1846 = vsub.f32 1.0, %v1845
    %v1847 = vmul.f32 %v1844, %v1846
    %v1848 = vadd.f32 %v1844, %v1847
    %vm1849 = vweird.f32 %v1843
    %vm1850 = vweird.f32 %v1844
    %vm1851 = vmor %vm1849, %vm1850
    %v1852 = vsel %vm1851, %v1844, %v1848
    %v1853 = vand.u32 2147483647, %v1843
    %vm1854 = vcmp.eq.f32.partialorder %v1853, 8.507059e+37
    %v1855 = vand.u32 %v1843, 2147483648
    %v1856 = vor.u32 1.1754944e-38, %v1855
    %v1857 = vsel %vm1854, %v1856, %v1852
    %v1858 = vmul.f32 1.0, %v1857
    %v1859 = vtanh.pop %v1819
    %v1860 = vxor.u32 %v1820, 2147483648
    %v1861 = vmul.f32 %v1860, 1.442695
    %v1862 = vpow.pop %v1861
    %v1863 = vadd.f32 %v1862, 1.0
    %v1864 = vrcp.pop %v1863
    %v1865 = vmul.f32 %v1863, %v1864
    %v1866 = vsub.f32 1.0, %v1865
    %v1867 = vmul.f32 %v1864, %v1866
    %v1868 = vadd.f32 %v1864, %v1867
    %vm1869 = vweird.f32 %v1863
    %vm1870 = vweird.f32 %v1864
    %vm1871 = vmor %vm1869, %vm1870
    %v1872 = vsel %vm1871, %v1864, %v1868
    %v1873 = vand.u32 2147483647, %v1863
    %vm1874 = vcmp.eq.f32.partialorder %v1873, 8.507059e+37
    %v1875 = vand.u32 %v1863, 2147483648
    %v1876 = vor.u32 1.1754944e-38, %v1875
    %v1877 = vsel %vm1874, %v1876, %v1872
    %v1878 = vmul.f32 1.0, %v1877
    %v1879 = vmul.f32 %v1858, %v1734
    %v1880 = vmul.f32 %v1839, %v1859
    %v1881 = vadd.f32 %v1879, %v1880
    %v1882 = vtanh.pop %v1881
    %v1883 = vmul.f32 %v1878, %v1882
    %v1884 = vxor.u32 %v387, 2147483648
    %v1885 = vmul.f32 %v1884, 1.442695
    %v1886 = vpow.pop %v1885
    %v1887 = vadd.f32 %v1886, 1.0
    %v1888 = vrcp.pop %v1887
    %v1889 = vmul.f32 %v1887, %v1888
    %v1890 = vsub.f32 1.0, %v1889
    %v1891 = vmul.f32 %v1888, %v1890
    %v1892 = vadd.f32 %v1888, %v1891
    %vm1893 = vweird.f32 %v1887
    %vm1894 = vweird.f32 %v1888
    %vm1895 = vmor %vm1893, %vm1894
    %v1896 = vsel %vm1895, %v1888, %v1892
    %v1897 = vand.u32 2147483647, %v1887
    %vm1898 = vcmp.eq.f32.partialorder %v1897, 8.507059e+37
    %v1899 = vand.u32 %v1887, 2147483648
    %v1900 = vor.u32 1.1754944e-38, %v1899
    %v1901 = vsel %vm1898, %v1900, %v1896
    %v1902 = vmul.f32 1.0, %v1901
    %v1903 = vxor.u32 %v423, 2147483648
    %v1904 = vmul.f32 %v1903, 1.442695
    %v1905 = vpow.pop %v1904
    %v1906 = vadd.f32 %v1905, 1.0
    %v1907 = vrcp.pop %v1906
    %v1908 = vmul.f32 %v1906, %v1907
    %v1909 = vsub.f32 1.0, %v1908
    %v1910 = vmul.f32 %v1907, %v1909
    %v1911 = vadd.f32 %v1907, %v1910
    %vm1912 = vweird.f32 %v1906
    %vm1913 = vweird.f32 %v1907
    %vm1914 = vmor %vm1912, %vm1913
    %v1915 = vsel %vm1914, %v1907, %v1911
    %v1916 = vand.u32 2147483647, %v1906
    %vm1917 = vcmp.eq.f32.partialorder %v1916, 8.507059e+37
    %v1918 = vand.u32 %v1906, 2147483648
    %v1919 = vor.u32 1.1754944e-38, %v1918
    %v1920 = vsel %vm1917, %v1919, %v1915
    %v1921 = vmul.f32 1.0, %v1920
    %v1922 = vtanh.pop %v459
    %v1923 = vxor.u32 %v495, 2147483648
    %v1924 = vmul.f32 %v1923, 1.442695
    %v1925 = vpow.pop %v1924
    %v1926 = vadd.f32 %v1925, 1.0
    %v1927 = vrcp.pop %v1926
    %v1928 = vmul.f32 %v1926, %v1927
    %v1929 = vsub.f32 1.0, %v1928
    %v1930 = vmul.f32 %v1927, %v1929
    %v1931 = vadd.f32 %v1927, %v1930
    %vm1932 = vweird.f32 %v1926
    %vm1933 = vweird.f32 %v1927
    %vm1934 = vmor %vm1932, %vm1933
    %v1935 = vsel %vm1934, %v1927, %v1931
    %v1936 = vand.u32 2147483647, %v1926
    %vm1937 = vcmp.eq.f32.partialorder %v1936, 8.507059e+37
    %v1938 = vand.u32 %v1926, 2147483648
    %v1939 = vor.u32 1.1754944e-38, %v1938
    %v1940 = vsel %vm1937, %v1939, %v1935
    %v1941 = vmul.f32 1.0, %v1940
    %v1942 = vmul.f32 %v1921, 0.0
    %v1943 = vmul.f32 %v1902, %v1922
    %v1944 = vadd.f32 %v1942, %v1943
    %v1945 = vtanh.pop %v1944
    %v1946 = vmul.f32 %v1941, %v1945
    %v1947 = vmax.f32 %v1883, 0.0
    %v1948 = vmax.f32 %v1946, 0.0
    %v1949 = vld [vmem:[#allocation7] sm:$0xff]
    %v1950 = vld [vmem:[#allocation7 + $0x8] sm:$0xff]
    %v1951 = vld [vmem:[#allocation7 + $0x10] sm:$0xff]
    %v1952 = vld [vmem:[#allocation7 + $0x18] sm:$0xff]
    %v1953 = vld [vmem:[#allocation7 + $0x20] sm:$0xff]
    %v1954 = vld [vmem:[#allocation7 + $0x28] sm:$0xff]
    %v1955 = vld [vmem:[#allocation7 + $0x30] sm:$0xff]
    %v1956 = vld [vmem:[#allocation7 + $0x38] sm:$0xff]
    %v1957 = vld [vmem:[#allocation7 + $0x40] sm:$0xff]
    %v1958 = vld [vmem:[#allocation7 + $0x48] sm:$0xff]
    %v1959 = vld [vmem:[#allocation7 + $0x50] sm:$0xff]
    %v1960 = vld [vmem:[#allocation7 + $0x58] sm:$0xff]
    %v1961 = vld [vmem:[#allocation7 + $0x60] sm:$0xff]
    %v1962 = vld [vmem:[#allocation7 + $0x68] sm:$0xff]
    %v1963 = vld [vmem:[#allocation7 + $0x70] sm:$0xff]
    %v1964 = vld [vmem:[#allocation7 + $0x78] sm:$0xff]
    %v1965 = vld [vmem:[#allocation8] sm:$0xff]
    %v1966 = vld [vmem:[#allocation8 + $0x8] sm:$0xff]
    %v1967 = vld [vmem:[#allocation8 + $0x10] sm:$0xff]
    %v1968 = vld [vmem:[#allocation8 + $0x18] sm:$0xff]
    %v1969 = vld [vmem:[#allocation8 + $0x20] sm:$0xff]
    %v1970 = vld [vmem:[#allocation8 + $0x28] sm:$0xff]
    %v1971 = vld [vmem:[#allocation8 + $0x30] sm:$0xff]
    %v1972 = vld [vmem:[#allocation8 + $0x38] sm:$0xff]
    %v1973 = vld [vmem:[#allocation8 + $0x40] sm:$0xff]
    %v1974 = vld [vmem:[#allocation8 + $0x48] sm:$0xff]
    %v1975 = vld [vmem:[#allocation8 + $0x50] sm:$0xff]
    %v1976 = vld [vmem:[#allocation8 + $0x58] sm:$0xff]
    %v1977 = vld [vmem:[#allocation8 + $0x60] sm:$0xff]
    %v1978 = vld [vmem:[#allocation8 + $0x68] sm:$0xff]
    %v1979 = vld [vmem:[#allocation8 + $0x70] sm:$0xff]
    %v1980 = vld [vmem:[#allocation8 + $0x78] sm:$0xff]
    %1981 = vmatpush.msra.mxu0 %v1980
    %1982 = vmatpush.msra.mxu0 %v1979
    %1983 = vmatpush.msra.mxu0 %v1978
    %1984 = vmatpush.msra.mxu0 %v1977
    %1985 = vmatpush.msra.mxu0 %v1976
    %1986 = vmatpush.msra.mxu0 %v1975
    %1987 = vmatpush.msra.mxu0 %v1974
    %1988 = vmatpush.msra.mxu0 %v1973
    %1989 = vmatpush.msra.mxu0 %v1972
    %1990 = vmatpush.msra.mxu0 %v1971
    %1991 = vmatpush.msra.mxu0 %v1970
    %1992 = vmatpush.msra.mxu0 %v1969
    %1993 = vmatpush.msra.mxu0 %v1968
    %1994 = vmatpush.msra.mxu0 %v1967
    %1995 = vmatpush.msra.mxu0 %v1966
    %1996 = vmatpush.msra.mxu0 %v1965
    %1997 = vmatmul.f32.gmra.mxu0 %v1948
    %v1998 = vpop.f32.mrf.mxu0
    %v1999 = vadd.f32 0.0, %v1998
    %2000 = vdwg.mxu0
    %2001 = vmatpush.msra.mxu0 %v1964
    %2002 = vmatpush.msra.mxu0 %v1963
    %2003 = vmatpush.msra.mxu0 %v1962
    %2004 = vmatpush.msra.mxu0 %v1961
    %2005 = vmatpush.msra.mxu0 %v1960
    %2006 = vmatpush.msra.mxu0 %v1959
    %2007 = vmatpush.msra.mxu0 %v1958
    %2008 = vmatpush.msra.mxu0 %v1957
    %2009 = vmatpush.msra.mxu0 %v1956
    %2010 = vmatpush.msra.mxu0 %v1955
    %2011 = vmatpush.msra.mxu0 %v1954
    %2012 = vmatpush.msra.mxu0 %v1953
    %2013 = vmatpush.msra.mxu0 %v1952
    %2014 = vmatpush.msra.mxu0 %v1951
    %2015 = vmatpush.msra.mxu0 %v1950
    %2016 = vmatpush.msra.mxu0 %v1949
    %2017 = vmatmul.f32.gmra.mxu0 %v1947
    %v2018 = vpop.f32.mrf.mxu0
    %v2019 = vadd.f32 %v1999, %v2018
    %2020 = vdwg.mxu0
    %v2021 = vld [vmem:[%s6] sm:$0x1]
    %v2023 = vperm.slane %v2021, 0
    %v2025 = vadd.f32 %v2019, %v2023
    %2026 = vst [vmem:[#allocation10] sm:$0xff] %v2025
    // Predicated region
    $region46: #{tpu_custom_call.1} parent=1 // pred_check
      _
    $region47: #{tpu_custom_call.1} parent=1 // pred_check_branch
      %2028 = sbr.rel (0) target = $region49
    $region48: #{tpu_custom_call.1} parent=1 // pred_region
      %2030 = vsyncadd [#allocation4], 0
      %s2032 = sshll.u32 [#allocation10], 4
      %s2033 = int_to_ptr.vmem [resolvable:$true] %s2032
      %s2034 = sshll.u32 %s7, 4
      %s2035 = int_to_ptr.hbm [resolvable:$true] %s2034
      %2037 = dma.vmem_to_hbm [thread:$0]  %s2033, 128, %s2035, [#allocation4]
    $region49: #{tpu_custom_call.1} parent=1 // pred_fallthru
      _
    // Predicated region
    $region50: #{tpu_custom_call.1} parent=1 // pred_check
      _
    $region51: #{tpu_custom_call.1} parent=1 // pred_check_branch
      %2039 = sbr.rel (0) target = $region53
    $region52: #{tpu_custom_call.1} parent=1 // pred_region
      %2041 = dma.done [#allocation4], 128
    $region53: #{tpu_custom_call.1} parent=1 // pred_fallthru
      _
    %2042 = vsyncpa [#allocation3], 1
    %2043 = vsyncpa [#allocation6], 1
    %2044 = vsyncpa [#allocation9], 1
    %2045 = vsyncpa [#allocation4], 1

</llo_original>
